<compile_context>
chip_gen: v7x
topology: tpu7x:2x2x1
jax: 0.10.0
libtpu: 0.0.40
codegen_flags: <defaults>
</compile_context>

<pallas_src>
import jax
import jax.numpy as jnp
from jax.experimental import pallas as pl
from jax.experimental.pallas import tpu as pltpu

# (fan_in, fan_out) of each Linear layer in the Sequential.
LAYER_DIMS = [(4, 50), (50, 100), (100, 200), (200, 100), (100, 50), (50, 4)]
# Padded width of y / of each layer's output (transposed layout: width = sublanes).
PAD_DIMS = [8, 128, 128, 256, 128, 128, 8]


def _round_up(x, m):
    return ((x + m - 1) // m) * m


def ode_mlp_kernel(y_ref,
                   w1_ref, w2_ref, w3_ref, w4_ref, w5_ref, w6_ref,
                   b1_ref, b2_ref, b3_ref, b4_ref, b5_ref, b6_ref,
                   out_ref):
    """Fused 6-layer MLP on one [8, TB] batch tile (batch on the lane axis)."""

    def layer(h, w_ref, b_ref, last=False):
        # [out_pad, in_pad] @ [in_pad, TB] -> [out_pad, TB]; bias broadcasts lanes.
        z = (jnp.dot(w_ref[...], h, preferred_element_type=jnp.float32)
             + b_ref[...])
        return z if last else jnp.tanh(z)

    h = y_ref[...]                                      # [8,   TB]
    h = layer(h, w1_ref, b1_ref)                        # [128, TB]
    h = layer(h, w2_ref, b2_ref)                        # [128, TB]
    h = layer(h, w3_ref, b3_ref)                        # [256, TB]
    h = layer(h, w4_ref, b4_ref)                        # [128, TB]
    h = layer(h, w5_ref, b5_ref)                        # [128, TB]
    out_ref[...] = layer(h, w6_ref, b6_ref, last=True)  # [8,   TB]


def _pad_params(params):
    """Transpose + zero-pad weights/biases to the padded widths (exact)."""
    weights, biases = params
    wts, bss = [], []
    for i, ((fi, fo), w, b) in enumerate(zip(LAYER_DIMS, weights, biases)):
        in_p, out_p = PAD_DIMS[i], PAD_DIMS[i + 1]
        wts.append(jnp.pad(w.T.astype(jnp.float32),
                           ((0, out_p - fo), (0, in_p - fi))))     # [out_p, in_p]
        bss.append(jnp.pad(b.astype(jnp.float32),
                           (0, out_p - fo)).reshape(out_p, 1))      # [out_p, 1]
    return wts, bss


def ode_forward(t, y, params, *, tb_max=1024):
    """Matches ODEModel.forward(t, y): t is accepted but unused by the network."""
    del t
    wts, bss = _pad_params(params)
    B, din = y.shape
    assert din == LAYER_DIMS[0][0]
    d_in_p, d_out_p = PAD_DIMS[0], PAD_DIMS[-1]
    d_out = LAYER_DIMS[-1][1]

    # Batch tiling: batch is the lane axis -> tiles are multiples of 128 lanes.
    B_lane = _round_up(max(B, 1), 128)
    TB = min(_round_up(tb_max, 128), B_lane)
    if B_lane >= 2 * 128:                       # v7x: keep both TensorCores busy
        TB = min(TB, _round_up(-(-B_lane // 2), 128))
    B_pad = _round_up(B_lane, TB)
    grid = (B_pad // TB,)

    # y -> [d_in_p, B_pad]; zero-padded rows/cols contribute nothing.
    y_t = jnp.pad(y.astype(jnp.float32),
                  ((0, B_pad - B), (0, d_in_p - din))).T

    const = lambda arr: pl.BlockSpec(arr.shape, lambda i: (0, 0))  # VMEM-resident

    out_t = pl.pallas_call(
        ode_mlp_kernel,
        out_shape=jax.ShapeDtypeStruct((d_out_p, B_pad), jnp.float32),
        grid=grid,
        in_specs=[pl.BlockSpec((d_in_p, TB), lambda i: (0, i))]    # y tiles pipeline
                 + [const(w) for w in wts]                         # weights resident
                 + [const(b) for b in bss],                        # biases resident
        out_specs=pl.BlockSpec((d_out_p, TB), lambda i: (0, i)),   # lane-dense stores
        compiler_params=pltpu.CompilerParams(
            dimension_semantics=("parallel",)),                    # v7x: 2 TCs
    )(y_t, *wts, *bss)

    return out_t[:d_out, :B].T                                     # [B, 4]


def make_params(key):
    """PyTorch-default-style init: U(-1/sqrt(fan_in), 1/sqrt(fan_in))."""
    weights, biases = [], []
    for fan_in, fan_out in LAYER_DIMS:
        key, kw, kb = jax.random.split(key, 3)
        s = float(fan_in) ** -0.5
        weights.append(jax.random.uniform(kw, (fan_in, fan_out), jnp.float32, -s, s))
        biases.append(jax.random.uniform(kb, (fan_out,), jnp.float32, -s, s))
    return weights, biases


def reference_forward(t, y, params):
    """Pure-JAX reference (same semantics as ODEModel.forward)."""
    del t
    weights, biases = params
    h = y
    n = len(weights)
    for i, (w, b) in enumerate(zip(weights, biases)):
        h = h @ w + b
        if i < n - 1:
            h = jnp.tanh(h)
    return h


if __name__ == "__main__":
    key = jax.random.PRNGKey(0)
    k_t, k_y, k_p = jax.random.split(key, 3)

    B = 8
    t = jax.random.uniform(k_t, (B, 1), jnp.float32)   # unused by the model
    y = jax.random.normal(k_y, (B, 4), jnp.float32)
    params = make_params(k_p)

    out = jax.block_until_ready(ode_forward(t, y, params))
    ref = reference_forward(t, y, params)

    assert out.shape == (B, 4), out.shape
    err = float(jnp.max(jnp.abs(out - ref)))
    assert jnp.allclose(out, ref, atol=2e-3, rtol=2e-3), err

    print("KERNEL_OK")
</pallas_src>

<mosaic_0001>
module attributes {stable_mosaic.version = 11 : i64} {
  func.func @ode_mlp_kernel(%arg0: i32, %arg1: memref<8x128xf32, #tpu.memory_space<vmem>>, %arg2: memref<128x8xf32, #tpu.memory_space<vmem>>, %arg3: memref<128x128xf32, #tpu.memory_space<vmem>>, %arg4: memref<256x128xf32, #tpu.memory_space<vmem>>, %arg5: memref<128x256xf32, #tpu.memory_space<vmem>>, %arg6: memref<128x128xf32, #tpu.memory_space<vmem>>, %arg7: memref<8x128xf32, #tpu.memory_space<vmem>>, %arg8: memref<128x1xf32, #tpu.memory_space<vmem>>, %arg9: memref<128x1xf32, #tpu.memory_space<vmem>>, %arg10: memref<256x1xf32, #tpu.memory_space<vmem>>, %arg11: memref<128x1xf32, #tpu.memory_space<vmem>>, %arg12: memref<128x1xf32, #tpu.memory_space<vmem>>, %arg13: memref<8x1xf32, #tpu.memory_space<vmem>>, %arg14: memref<8x128xf32, #tpu.memory_space<vmem>>) attributes {dimension_semantics = [#tpu.dimension_semantics<parallel>], iteration_bounds = array<i64: 1>, scalar_prefetch = 0 : i64, scratch_operands = 0 : i64, tpu.core_type = #tpu.core_type<tc>, window_params = [{transform_indices = @transform_0, window_bounds = array<i64: 8, 128>}, {pipeline_mode = #tpu.pipeline_mode<synchronous>, transform_indices = @transform_1, window_bounds = array<i64: 128, 8>}, {pipeline_mode = #tpu.pipeline_mode<synchronous>, transform_indices = @transform_2, window_bounds = array<i64: 128, 128>}, {pipeline_mode = #tpu.pipeline_mode<synchronous>, transform_indices = @transform_3, window_bounds = array<i64: 256, 128>}, {pipeline_mode = #tpu.pipeline_mode<synchronous>, transform_indices = @transform_4, window_bounds = array<i64: 128, 256>}, {pipeline_mode = #tpu.pipeline_mode<synchronous>, transform_indices = @transform_5, window_bounds = array<i64: 128, 128>}, {pipeline_mode = #tpu.pipeline_mode<synchronous>, transform_indices = @transform_6, window_bounds = array<i64: 8, 128>}, {pipeline_mode = #tpu.pipeline_mode<synchronous>, transform_indices = @transform_7, window_bounds = array<i64: 128, 1>}, {pipeline_mode = #tpu.pipeline_mode<synchronous>, transform_indices = @transform_8, window_bounds = array<i64: 128, 1>}, {pipeline_mode = #tpu.pipeline_mode<synchronous>, transform_indices = @transform_9, window_bounds = array<i64: 256, 1>}, {pipeline_mode = #tpu.pipeline_mode<synchronous>, transform_indices = @transform_10, window_bounds = array<i64: 128, 1>}, {pipeline_mode = #tpu.pipeline_mode<synchronous>, transform_indices = @transform_11, window_bounds = array<i64: 128, 1>}, {pipeline_mode = #tpu.pipeline_mode<synchronous>, transform_indices = @transform_12, window_bounds = array<i64: 8, 1>}, {transform_indices = @transform_13, window_bounds = array<i64: 8, 128>}]} {
    %c0 = arith.constant 0 : index
    %c0_0 = arith.constant 0 : index
    %0 = vector.load %arg1[%c0, %c0_0] : memref<8x128xf32, #tpu.memory_space<vmem>>, vector<8x128xf32>
    %c0_1 = arith.constant 0 : index
    %c0_2 = arith.constant 0 : index
    %1 = vector.load %arg2[%c0_1, %c0_2] : memref<128x8xf32, #tpu.memory_space<vmem>>, vector<128x8xf32>
    %cst = arith.constant dense<0.000000e+00> : vector<128x128xf32>
    %2 = tpu.matmul %1, %0, %cst {dimension_numbers = #tpu.dot_dimension_numbers<[1], [0], [0], [1], [0, 0, 1, 1], [], []>} : vector<128x8xf32>, vector<8x128xf32>, vector<128x128xf32> -> vector<128x128xf32>
    %c0_3 = arith.constant 0 : index
    %c0_4 = arith.constant 0 : index
    %3 = vector.load %arg8[%c0_3, %c0_4] : memref<128x1xf32, #tpu.memory_space<vmem>>, vector<128x1xf32>
    %4 = vector.broadcast %3 : vector<128x1xf32> to vector<128x128xf32>
    %5 = arith.addf %2, %4 : vector<128x128xf32>
    %6 = math.tanh %5 : vector<128x128xf32>
    %c0_5 = arith.constant 0 : index
    %c0_6 = arith.constant 0 : index
    %7 = vector.load %arg3[%c0_5, %c0_6] : memref<128x128xf32, #tpu.memory_space<vmem>>, vector<128x128xf32>
    %cst_7 = arith.constant dense<0.000000e+00> : vector<128x128xf32>
    %8 = tpu.matmul %7, %6, %cst_7 {dimension_numbers = #tpu.dot_dimension_numbers<[1], [0], [0], [1], [0, 0, 1, 1], [], []>} : vector<128x128xf32>, vector<128x128xf32>, vector<128x128xf32> -> vector<128x128xf32>
    %c0_8 = arith.constant 0 : index
    %c0_9 = arith.constant 0 : index
    %9 = vector.load %arg9[%c0_8, %c0_9] : memref<128x1xf32, #tpu.memory_space<vmem>>, vector<128x1xf32>
    %10 = vector.broadcast %9 : vector<128x1xf32> to vector<128x128xf32>
    %11 = arith.addf %8, %10 : vector<128x128xf32>
    %12 = math.tanh %11 : vector<128x128xf32>
    %c0_10 = arith.constant 0 : index
    %c0_11 = arith.constant 0 : index
    %13 = vector.load %arg4[%c0_10, %c0_11] : memref<256x128xf32, #tpu.memory_space<vmem>>, vector<256x128xf32>
    %cst_12 = arith.constant dense<0.000000e+00> : vector<256x128xf32>
    %14 = tpu.matmul %13, %12, %cst_12 {dimension_numbers = #tpu.dot_dimension_numbers<[1], [0], [0], [1], [0, 0, 1, 1], [], []>} : vector<256x128xf32>, vector<128x128xf32>, vector<256x128xf32> -> vector<256x128xf32>
    %c0_13 = arith.constant 0 : index
    %c0_14 = arith.constant 0 : index
    %15 = vector.load %arg10[%c0_13, %c0_14] : memref<256x1xf32, #tpu.memory_space<vmem>>, vector<256x1xf32>
    %16 = vector.broadcast %15 : vector<256x1xf32> to vector<256x128xf32>
    %17 = arith.addf %14, %16 : vector<256x128xf32>
    %18 = math.tanh %17 : vector<256x128xf32>
    %c0_15 = arith.constant 0 : index
    %c0_16 = arith.constant 0 : index
    %19 = vector.load %arg5[%c0_15, %c0_16] : memref<128x256xf32, #tpu.memory_space<vmem>>, vector<128x256xf32>
    %cst_17 = arith.constant dense<0.000000e+00> : vector<128x128xf32>
    %20 = tpu.matmul %19, %18, %cst_17 {dimension_numbers = #tpu.dot_dimension_numbers<[1], [0], [0], [1], [0, 0, 1, 1], [], []>} : vector<128x256xf32>, vector<256x128xf32>, vector<128x128xf32> -> vector<128x128xf32>
    %c0_18 = arith.constant 0 : index
    %c0_19 = arith.constant 0 : index
    %21 = vector.load %arg11[%c0_18, %c0_19] : memref<128x1xf32, #tpu.memory_space<vmem>>, vector<128x1xf32>
    %22 = vector.broadcast %21 : vector<128x1xf32> to vector<128x128xf32>
    %23 = arith.addf %20, %22 : vector<128x128xf32>
    %24 = math.tanh %23 : vector<128x128xf32>
    %c0_20 = arith.constant 0 : index
    %c0_21 = arith.constant 0 : index
    %25 = vector.load %arg6[%c0_20, %c0_21] : memref<128x128xf32, #tpu.memory_space<vmem>>, vector<128x128xf32>
    %cst_22 = arith.constant dense<0.000000e+00> : vector<128x128xf32>
    %26 = tpu.matmul %25, %24, %cst_22 {dimension_numbers = #tpu.dot_dimension_numbers<[1], [0], [0], [1], [0, 0, 1, 1], [], []>} : vector<128x128xf32>, vector<128x128xf32>, vector<128x128xf32> -> vector<128x128xf32>
    %c0_23 = arith.constant 0 : index
    %c0_24 = arith.constant 0 : index
    %27 = vector.load %arg12[%c0_23, %c0_24] : memref<128x1xf32, #tpu.memory_space<vmem>>, vector<128x1xf32>
    %28 = vector.broadcast %27 : vector<128x1xf32> to vector<128x128xf32>
    %29 = arith.addf %26, %28 : vector<128x128xf32>
    %30 = math.tanh %29 : vector<128x128xf32>
    %c0_25 = arith.constant 0 : index
    %c0_26 = arith.constant 0 : index
    %31 = vector.load %arg7[%c0_25, %c0_26] : memref<8x128xf32, #tpu.memory_space<vmem>>, vector<8x128xf32>
    %cst_27 = arith.constant dense<0.000000e+00> : vector<8x128xf32>
    %32 = tpu.matmul %31, %30, %cst_27 {dimension_numbers = #tpu.dot_dimension_numbers<[1], [0], [0], [1], [0, 0, 1, 1], [], []>} : vector<8x128xf32>, vector<128x128xf32>, vector<8x128xf32> -> vector<8x128xf32>
    %c0_28 = arith.constant 0 : index
    %c0_29 = arith.constant 0 : index
    %33 = vector.load %arg13[%c0_28, %c0_29] : memref<8x1xf32, #tpu.memory_space<vmem>>, vector<8x1xf32>
    %34 = vector.broadcast %33 : vector<8x1xf32> to vector<8x128xf32>
    %35 = arith.addf %32, %34 : vector<8x128xf32>
    %c0_30 = arith.constant 0 : index
    %c0_31 = arith.constant 0 : index
    %36 = vector.load %arg14[%c0_30, %c0_31] : memref<8x128xf32, #tpu.memory_space<vmem>>, vector<8x128xf32>
    tpu.vector_store %arg14[%c0_30, %c0_31], %35 {strides = array<i32>} : memref<8x128xf32, #tpu.memory_space<vmem>>, vector<8x128xf32>,
    return
  }
  func.func @transform_0(%arg0: i32) -> (i32, i32) {
    %c0_i32 = arith.constant 0 : i32
    %c0_i32_0 = arith.constant 0 : i32
    return %c0_i32, %arg0 : i32, i32
  }
  func.func @transform_1(%arg0: i32) -> (i32, i32) {
    %c0_i32 = arith.constant 0 : i32
    %c0_i32_0 = arith.constant 0 : i32
    %c0_i32_1 = arith.constant 0 : i32
    return %c0_i32, %c0_i32_0 : i32, i32
  }
  func.func @transform_2(%arg0: i32) -> (i32, i32) {
    %c0_i32 = arith.constant 0 : i32
    %c0_i32_0 = arith.constant 0 : i32
    %c0_i32_1 = arith.constant 0 : i32
    return %c0_i32, %c0_i32_0 : i32, i32
  }
  func.func @transform_3(%arg0: i32) -> (i32, i32) {
    %c0_i32 = arith.constant 0 : i32
    %c0_i32_0 = arith.constant 0 : i32
    %c0_i32_1 = arith.constant 0 : i32
    return %c0_i32, %c0_i32_0 : i32, i32
  }
  func.func @transform_4(%arg0: i32) -> (i32, i32) {
    %c0_i32 = arith.constant 0 : i32
    %c0_i32_0 = arith.constant 0 : i32
    %c0_i32_1 = arith.constant 0 : i32
    return %c0_i32, %c0_i32_0 : i32, i32
  }
  func.func @transform_5(%arg0: i32) -> (i32, i32) {
    %c0_i32 = arith.constant 0 : i32
    %c0_i32_0 = arith.constant 0 : i32
    %c0_i32_1 = arith.constant 0 : i32
    return %c0_i32, %c0_i32_0 : i32, i32
  }
  func.func @transform_6(%arg0: i32) -> (i32, i32) {
    %c0_i32 = arith.constant 0 : i32
    %c0_i32_0 = arith.constant 0 : i32
    %c0_i32_1 = arith.constant 0 : i32
    return %c0_i32, %c0_i32_0 : i32, i32
  }
  func.func @transform_7(%arg0: i32) -> (i32, i32) {
    %c0_i32 = arith.constant 0 : i32
    %c0_i32_0 = arith.constant 0 : i32
    %c0_i32_1 = arith.constant 0 : i32
    return %c0_i32, %c0_i32_0 : i32, i32
  }
  func.func @transform_8(%arg0: i32) -> (i32, i32) {
    %c0_i32 = arith.constant 0 : i32
    %c0_i32_0 = arith.constant 0 : i32
    %c0_i32_1 = arith.constant 0 : i32
    return %c0_i32, %c0_i32_0 : i32, i32
  }
  func.func @transform_9(%arg0: i32) -> (i32, i32) {
    %c0_i32 = arith.constant 0 : i32
    %c0_i32_0 = arith.constant 0 : i32
    %c0_i32_1 = arith.constant 0 : i32
    return %c0_i32, %c0_i32_0 : i32, i32
  }
  func.func @transform_10(%arg0: i32) -> (i32, i32) {
    %c0_i32 = arith.constant 0 : i32
    %c0_i32_0 = arith.constant 0 : i32
    %c0_i32_1 = arith.constant 0 : i32
    return %c0_i32, %c0_i32_0 : i32, i32
  }
  func.func @transform_11(%arg0: i32) -> (i32, i32) {
    %c0_i32 = arith.constant 0 : i32
    %c0_i32_0 = arith.constant 0 : i32
    %c0_i32_1 = arith.constant 0 : i32
    return %c0_i32, %c0_i32_0 : i32, i32
  }
  func.func @transform_12(%arg0: i32) -> (i32, i32) {
    %c0_i32 = arith.constant 0 : i32
    %c0_i32_0 = arith.constant 0 : i32
    %c0_i32_1 = arith.constant 0 : i32
    return %c0_i32, %c0_i32_0 : i32, i32
  }
  func.func @transform_13(%arg0: i32) -> (i32, i32) {
    %c0_i32 = arith.constant 0 : i32
    %c0_i32_0 = arith.constant 0 : i32
    return %c0_i32, %arg0 : i32, i32
  }
}

</mosaic_0001>

<llo_original>
// kernel: tpu_custom_call.1
$region0: #{tpu_custom_call.1}
  #allocation0 [shape = 'u32[]', space=smem, size = 0x4, offset = 0x4, fixed_abs, tag = 'smem constant byte address 0x4 - core index']
  #allocation1 [shape = 'u32[144,128]{1,0:T(1,128)}', space=vmem, size = 0x12000, scoped, tag = 'internal scratch']
  %s0 = inlined_call_operand.vmem [shape: f32[8,128], index: 0, kind: input, shape index: {}]
  %s1 = inlined_call_operand.vmem [shape: f32[128,8], index: 1, kind: input, shape index: {}]
  %s2 = inlined_call_operand.vmem [shape: f32[128,128], index: 2, kind: input, shape index: {}]
  %s3 = inlined_call_operand.vmem [shape: f32[256,128], index: 3, kind: input, shape index: {}]
  %s4 = inlined_call_operand.vmem [shape: f32[128,256], index: 4, kind: input, shape index: {}]
  %s5 = inlined_call_operand.vmem [shape: f32[128,128], index: 5, kind: input, shape index: {}]
  %s6 = inlined_call_operand.vmem [shape: f32[8,128], index: 6, kind: input, shape index: {}]
  %s7 = inlined_call_operand.vmem [shape: f32[128,1], index: 7, kind: input, shape index: {}]
  %s8 = inlined_call_operand.vmem [shape: f32[128,1], index: 8, kind: input, shape index: {}]
  %s9 = inlined_call_operand.vmem [shape: f32[256,1], index: 9, kind: input, shape index: {}]
  %s10 = inlined_call_operand.vmem [shape: f32[128,1], index: 10, kind: input, shape index: {}]
  %s11 = inlined_call_operand.vmem [shape: f32[128,1], index: 11, kind: input, shape index: {}]
  %s12 = inlined_call_operand.vmem [shape: f32[8,1], index: 12, kind: input, shape index: {}]
  %s13 = inlined_call_operand.hbm [shape: f32[8,128], index: 13, kind: output, shape index: {}]
  %s14 = sld [smem:[#allocation0]]
  $region62: #{tpu_custom_call.1} parent=0
    _
  %s16 = ssub.s32 1, %s14
  %s17 = scalar_select 0, %s16, %s14
  $region1: #{tpu_custom_call.1} parent=0
    #allocation2 [shape = 'u8[4096]{0}', space=vmem, size = 0x1000, scoped, tag = 'output window, operand 0, single buffered']
    #allocation3 [shape = 's32[1]{0}', space=sflag, size = 0x4, scoped, tag = 'scoped memory for tpu_custom_call.1']
    %18 = vsyncpa [#allocation3], 0
    // Predicated region
    $region2: #{tpu_custom_call.1} parent=1 // pred_check
      _
    $region3: #{tpu_custom_call.1} parent=1 // pred_check_branch
      %20 = sbr.rel (0) target = $region5
    $region4: #{tpu_custom_call.1} parent=1 // pred_region
      _
    $region5: #{tpu_custom_call.1} parent=1 // pred_fallthru
      _
    // Predicated region
    $region6: #{tpu_custom_call.1} parent=1 // pred_check
      _
    $region7: #{tpu_custom_call.1} parent=1 // pred_check_branch
      %22 = sbr.rel (0) target = $region9
    $region8: #{tpu_custom_call.1} parent=1 // pred_region
      _
    $region9: #{tpu_custom_call.1} parent=1 // pred_fallthru
      _
    // Predicated region
    $region10: #{tpu_custom_call.1} parent=1 // pred_check
      _
    $region11: #{tpu_custom_call.1} parent=1 // pred_check_branch
      %24 = sbr.rel (0) target = $region13
    $region12: #{tpu_custom_call.1} parent=1 // pred_region
      _
    $region13: #{tpu_custom_call.1} parent=1 // pred_fallthru
      _
    // Predicated region
    $region14: #{tpu_custom_call.1} parent=1 // pred_check
      _
    $region15: #{tpu_custom_call.1} parent=1 // pred_check_branch
      %26 = sbr.rel (0) target = $region17
    $region16: #{tpu_custom_call.1} parent=1 // pred_region
      _
    $region17: #{tpu_custom_call.1} parent=1 // pred_fallthru
      _
    // Predicated region
    $region18: #{tpu_custom_call.1} parent=1 // pred_check
      _
    $region19: #{tpu_custom_call.1} parent=1 // pred_check_branch
      %28 = sbr.rel (0) target = $region21
    $region20: #{tpu_custom_call.1} parent=1 // pred_region
      _
    $region21: #{tpu_custom_call.1} parent=1 // pred_fallthru
      _
    // Predicated region
    $region22: #{tpu_custom_call.1} parent=1 // pred_check
      _
    $region23: #{tpu_custom_call.1} parent=1 // pred_check_branch
      %30 = sbr.rel (0) target = $region25
    $region24: #{tpu_custom_call.1} parent=1 // pred_region
      _
    $region25: #{tpu_custom_call.1} parent=1 // pred_fallthru
      _
    // Predicated region
    $region26: #{tpu_custom_call.1} parent=1 // pred_check
      _
    $region27: #{tpu_custom_call.1} parent=1 // pred_check_branch
      %32 = sbr.rel (0) target = $region29
    $region28: #{tpu_custom_call.1} parent=1 // pred_region
      _
    $region29: #{tpu_custom_call.1} parent=1 // pred_fallthru
      _
    // Predicated region
    $region30: #{tpu_custom_call.1} parent=1 // pred_check
      _
    $region31: #{tpu_custom_call.1} parent=1 // pred_check_branch
      %34 = sbr.rel (0) target = $region33
    $region32: #{tpu_custom_call.1} parent=1 // pred_region
      _
    $region33: #{tpu_custom_call.1} parent=1 // pred_fallthru
      _
    // Predicated region
    $region34: #{tpu_custom_call.1} parent=1 // pred_check
      _
    $region35: #{tpu_custom_call.1} parent=1 // pred_check_branch
      %36 = sbr.rel (0) target = $region37
    $region36: #{tpu_custom_call.1} parent=1 // pred_region
      _
    $region37: #{tpu_custom_call.1} parent=1 // pred_fallthru
      _
    // Predicated region
    $region38: #{tpu_custom_call.1} parent=1 // pred_check
      _
    $region39: #{tpu_custom_call.1} parent=1 // pred_check_branch
      %38 = sbr.rel (0) target = $region41
    $region40: #{tpu_custom_call.1} parent=1 // pred_region
      _
    $region41: #{tpu_custom_call.1} parent=1 // pred_fallthru
      _
    // Predicated region
    $region42: #{tpu_custom_call.1} parent=1 // pred_check
      _
    $region43: #{tpu_custom_call.1} parent=1 // pred_check_branch
      %40 = sbr.rel (0) target = $region45
    $region44: #{tpu_custom_call.1} parent=1 // pred_region
      _
    $region45: #{tpu_custom_call.1} parent=1 // pred_fallthru
      _
    // Predicated region
    $region46: #{tpu_custom_call.1} parent=1 // pred_check
      _
    $region47: #{tpu_custom_call.1} parent=1 // pred_check_branch
      %42 = sbr.rel (0) target = $region49
    $region48: #{tpu_custom_call.1} parent=1 // pred_region
      _
    $region49: #{tpu_custom_call.1} parent=1 // pred_fallthru
      _
    // Predicated region
    $region50: #{tpu_custom_call.1} parent=1 // pred_check
      _
    $region51: #{tpu_custom_call.1} parent=1 // pred_check_branch
      %44 = sbr.rel (0) target = $region53
    $region52: #{tpu_custom_call.1} parent=1 // pred_region
      _
    $region53: #{tpu_custom_call.1} parent=1 // pred_fallthru
      _
    %v45 = vld [vmem:[%s0] sm:$0xff]
    %v46 = vld [vmem:[%s1] sm:$0xff]
    %v47 = vld [vmem:[%s1 + $0x8] sm:$0xff]
    %v48 = vld [vmem:[%s1 + $0x10] sm:$0xff]
    %v49 = vld [vmem:[%s1 + $0x18] sm:$0xff]
    %v50 = vld [vmem:[%s1 + $0x20] sm:$0xff]
    %v51 = vld [vmem:[%s1 + $0x28] sm:$0xff]
    %v52 = vld [vmem:[%s1 + $0x30] sm:$0xff]
    %v53 = vld [vmem:[%s1 + $0x38] sm:$0xff]
    %v54 = vld [vmem:[%s1 + $0x40] sm:$0xff]
    %v55 = vld [vmem:[%s1 + $0x48] sm:$0xff]
    %v56 = vld [vmem:[%s1 + $0x50] sm:$0xff]
    %v57 = vld [vmem:[%s1 + $0x58] sm:$0xff]
    %v58 = vld [vmem:[%s1 + $0x60] sm:$0xff]
    %v59 = vld [vmem:[%s1 + $0x68] sm:$0xff]
    %v60 = vld [vmem:[%s1 + $0x70] sm:$0xff]
    %v61 = vld [vmem:[%s1 + $0x78] sm:$0xff]
    %v62 = vld [vmem:[%s7] sm:$0xff]
    %v63 = vld [vmem:[%s7 + $0x8] sm:$0xff]
    %v64 = vld [vmem:[%s7 + $0x10] sm:$0xff]
    %v65 = vld [vmem:[%s7 + $0x18] sm:$0xff]
    %v66 = vld [vmem:[%s7 + $0x20] sm:$0xff]
    %v67 = vld [vmem:[%s7 + $0x28] sm:$0xff]
    %v68 = vld [vmem:[%s7 + $0x30] sm:$0xff]
    %v69 = vld [vmem:[%s7 + $0x38] sm:$0xff]
    %v70 = vld [vmem:[%s7 + $0x40] sm:$0xff]
    %v71 = vld [vmem:[%s7 + $0x48] sm:$0xff]
    %v72 = vld [vmem:[%s7 + $0x50] sm:$0xff]
    %v73 = vld [vmem:[%s7 + $0x58] sm:$0xff]
    %v74 = vld [vmem:[%s7 + $0x60] sm:$0xff]
    %v75 = vld [vmem:[%s7 + $0x68] sm:$0xff]
    %v76 = vld [vmem:[%s7 + $0x70] sm:$0xff]
    %v77 = vld [vmem:[%s7 + $0x78] sm:$0xff]
    %79 = vset.pattern.permute.xlu0 0
    %80 = vperm.xlu0 %79, %v62
    %v81 = vpop.permute.xlu0 %80
    %84 = vset.pattern.permute.xlu0 0
    %85 = vperm.xlu0 %84, %v63
    %v86 = vpop.permute.xlu0 %85
    %89 = vset.pattern.permute.xlu0 0
    %90 = vperm.xlu0 %89, %v64
    %v91 = vpop.permute.xlu0 %90
    %94 = vset.pattern.permute.xlu0 0
    %95 = vperm.xlu0 %94, %v65
    %v96 = vpop.permute.xlu0 %95
    %99 = vset.pattern.permute.xlu0 0
    %100 = vperm.xlu0 %99, %v66
    %v101 = vpop.permute.xlu0 %100
    %104 = vset.pattern.permute.xlu0 0
    %105 = vperm.xlu0 %104, %v67
    %v106 = vpop.permute.xlu0 %105
    %109 = vset.pattern.permute.xlu0 0
    %110 = vperm.xlu0 %109, %v68
    %v111 = vpop.permute.xlu0 %110
    %114 = vset.pattern.permute.xlu0 0
    %115 = vperm.xlu0 %114, %v69
    %v116 = vpop.permute.xlu0 %115
    %119 = vset.pattern.permute.xlu0 0
    %120 = vperm.xlu0 %119, %v70
    %v121 = vpop.permute.xlu0 %120
    %124 = vset.pattern.permute.xlu0 0
    %125 = vperm.xlu0 %124, %v71
    %v126 = vpop.permute.xlu0 %125
    %129 = vset.pattern.permute.xlu0 0
    %130 = vperm.xlu0 %129, %v72
    %v131 = vpop.permute.xlu0 %130
    %134 = vset.pattern.permute.xlu0 0
    %135 = vperm.xlu0 %134, %v73
    %v136 = vpop.permute.xlu0 %135
    %139 = vset.pattern.permute.xlu0 0
    %140 = vperm.xlu0 %139, %v74
    %v141 = vpop.permute.xlu0 %140
    %144 = vset.pattern.permute.xlu0 0
    %145 = vperm.xlu0 %144, %v75
    %v146 = vpop.permute.xlu0 %145
    %149 = vset.pattern.permute.xlu0 0
    %150 = vperm.xlu0 %149, %v76
    %v151 = vpop.permute.xlu0 %150
    %154 = vset.pattern.permute.xlu0 0
    %155 = vperm.xlu0 %154, %v77
    %v156 = vpop.permute.xlu0 %155
    %vm158 = vcmask 64512
    %v160 = vsel %vm158, %v46, 0
    %v163 = vsel %vm158, %v47, 0
    %v166 = vsel %vm158, %v48, 0
    %v169 = vsel %vm158, %v49, 0
    %v172 = vsel %vm158, %v50, 0
    %v175 = vsel %vm158, %v51, 0
    %v178 = vsel %vm158, %v52, 0
    %v181 = vsel %vm158, %v53, 0
    %v184 = vsel %vm158, %v54, 0
    %v187 = vsel %vm158, %v55, 0
    %v190 = vsel %vm158, %v56, 0
    %v193 = vsel %vm158, %v57, 0
    %v196 = vsel %vm158, %v58, 0
    %v199 = vsel %vm158, %v59, 0
    %v202 = vsel %vm158, %v60, 0
    %v205 = vsel %vm158, %v61, 0
    %207 = vmatprep.subr.mxu0 0.0
    %208 = vmatpush1.msra.mxu0 %v45
    %209 = vmatprep.subr.mxu0 0.0
    %210 = vmatpush1.msra.mxu0 0.0
    %211 = vmatprep.subr.mxu0 0.0
    %212 = vmatpush1.msra.mxu0 0.0
    %213 = vmatprep.subr.mxu0 0.0
    %214 = vmatpush1.msra.mxu0 0.0
    %215 = vmatprep.subr.mxu0 0.0
    %216 = vmatpush1.msra.mxu0 0.0
    %217 = vmatprep.subr.mxu0 0.0
    %218 = vmatpush1.msra.mxu0 0.0
    %219 = vmatprep.subr.mxu0 0.0
    %220 = vmatpush1.msra.mxu0 0.0
    %221 = vmatprep.subr.mxu0 0.0
    %222 = vmatpush1.msra.mxu0 0.0
    %223 = vmatprep.subr.mxu0 0.0
    %224 = vmatpush1.msra.mxu0 0.0
    %225 = vmatprep.subr.mxu0 0.0
    %226 = vmatpush1.msra.mxu0 0.0
    %227 = vmatprep.subr.mxu0 0.0
    %228 = vmatpush1.msra.mxu0 0.0
    %229 = vmatprep.subr.mxu0 0.0
    %230 = vmatpush1.msra.mxu0 0.0
    %231 = vmatprep.subr.mxu0 0.0
    %232 = vmatpush1.msra.mxu0 0.0
    %233 = vmatprep.subr.mxu0 0.0
    %234 = vmatpush1.msra.mxu0 0.0
    %235 = vmatprep.subr.mxu0 0.0
    %236 = vmatpush1.msra.mxu0 0.0
    %237 = vmatprep.subr.mxu0 0.0
    %238 = vmatpush1.msra.mxu0 0.0
    %239 = vmatprep.subr.mxu0 0.0
    %240 = vmatpush1.msra.mxu0 0.0
    %241 = vmatprep.subr.mxu0 0.0
    %242 = vmatpush1.msra.mxu0 0.0
    %243 = vmatprep.subr.mxu0 0.0
    %244 = vmatpush1.msra.mxu0 0.0
    %245 = vmatprep.subr.mxu0 0.0
    %246 = vmatpush1.msra.mxu0 0.0
    %247 = vmatprep.subr.mxu0 0.0
    %248 = vmatpush1.msra.mxu0 0.0
    %249 = vmatprep.subr.mxu0 0.0
    %250 = vmatpush1.msra.mxu0 0.0
    %251 = vmatprep.subr.mxu0 0.0
    %252 = vmatpush1.msra.mxu0 0.0
    %253 = vmatprep.subr.mxu0 0.0
    %254 = vmatpush1.msra.mxu0 0.0
    %255 = vmatprep.subr.mxu0 0.0
    %256 = vmatpush1.msra.mxu0 0.0
    %257 = vmatprep.subr.mxu0 0.0
    %258 = vmatpush1.msra.mxu0 0.0
    %259 = vmatprep.subr.mxu0 0.0
    %260 = vmatpush1.msra.mxu0 0.0
    %261 = vmatprep.subr.mxu0 0.0
    %262 = vmatpush1.msra.mxu0 0.0
    %263 = vmatprep.subr.mxu0 0.0
    %264 = vmatpush1.msra.mxu0 0.0
    %265 = vmatprep.subr.mxu0 0.0
    %266 = vmatpush1.msra.mxu0 0.0
    %267 = vmatprep.subr.mxu0 0.0
    %268 = vmatpush1.msra.mxu0 0.0
    %269 = vmatprep.subr.mxu0 0.0
    %270 = vmatpush1.msra.mxu0 0.0
    %271 = vmatprep.mubr.f32.mxu0 0.0
    %272 = vmatmul.mubr.f32.gmra.mrb[0].mxu0 %v160
    %v273 = vpop.f32.mrb[0].mxu0
    %v274 = vadd.f32 %v81, %v273
    %v275 = vpop.f32.mrb[0].mxu0
    %276 = vmatprep.mubr.f32.mxu0 0.0
    %277 = vmatmul.mubr.f32.gmra.mrb[0].mxu0 %v163
    %v278 = vpop.f32.mrb[0].mxu0
    %v279 = vadd.f32 %v86, %v278
    %v280 = vpop.f32.mrb[0].mxu0
    %281 = vmatprep.mubr.f32.mxu0 0.0
    %282 = vmatmul.mubr.f32.gmra.mrb[0].mxu0 %v166
    %v283 = vpop.f32.mrb[0].mxu0
    %v284 = vadd.f32 %v91, %v283
    %v285 = vpop.f32.mrb[0].mxu0
    %286 = vmatprep.mubr.f32.mxu0 0.0
    %287 = vmatmul.mubr.f32.gmra.mrb[0].mxu0 %v169
    %v288 = vpop.f32.mrb[0].mxu0
    %v289 = vadd.f32 %v96, %v288
    %v290 = vpop.f32.mrb[0].mxu0
    %291 = vmatprep.mubr.f32.mxu0 0.0
    %292 = vmatmul.mubr.f32.gmra.mrb[0].mxu0 %v172
    %v293 = vpop.f32.mrb[0].mxu0
    %v294 = vadd.f32 %v101, %v293
    %v295 = vpop.f32.mrb[0].mxu0
    %296 = vmatprep.mubr.f32.mxu0 0.0
    %297 = vmatmul.mubr.f32.gmra.mrb[0].mxu0 %v175
    %v298 = vpop.f32.mrb[0].mxu0
    %v299 = vadd.f32 %v106, %v298
    %v300 = vpop.f32.mrb[0].mxu0
    %301 = vmatprep.mubr.f32.mxu0 0.0
    %302 = vmatmul.mubr.f32.gmra.mrb[0].mxu0 %v178
    %v303 = vpop.f32.mrb[0].mxu0
    %v304 = vadd.f32 %v111, %v303
    %v305 = vpop.f32.mrb[0].mxu0
    %306 = vmatprep.mubr.f32.mxu0 0.0
    %307 = vmatmul.mubr.f32.gmra.mrb[0].mxu0 %v181
    %v308 = vpop.f32.mrb[0].mxu0
    %v309 = vadd.f32 %v116, %v308
    %v310 = vpop.f32.mrb[0].mxu0
    %311 = vmatprep.mubr.f32.mxu0 0.0
    %312 = vmatmul.mubr.f32.gmra.mrb[0].mxu0 %v184
    %v313 = vpop.f32.mrb[0].mxu0
    %v314 = vadd.f32 %v121, %v313
    %v315 = vpop.f32.mrb[0].mxu0
    %316 = vmatprep.mubr.f32.mxu0 0.0
    %317 = vmatmul.mubr.f32.gmra.mrb[0].mxu0 %v187
    %v318 = vpop.f32.mrb[0].mxu0
    %v319 = vadd.f32 %v126, %v318
    %v320 = vpop.f32.mrb[0].mxu0
    %321 = vmatprep.mubr.f32.mxu0 0.0
    %322 = vmatmul.mubr.f32.gmra.mrb[0].mxu0 %v190
    %v323 = vpop.f32.mrb[0].mxu0
    %v324 = vadd.f32 %v131, %v323
    %v325 = vpop.f32.mrb[0].mxu0
    %326 = vmatprep.mubr.f32.mxu0 0.0
    %327 = vmatmul.mubr.f32.gmra.mrb[0].mxu0 %v193
    %v328 = vpop.f32.mrb[0].mxu0
    %v329 = vadd.f32 %v136, %v328
    %v330 = vpop.f32.mrb[0].mxu0
    %331 = vmatprep.mubr.f32.mxu0 0.0
    %332 = vmatmul.mubr.f32.gmra.mrb[0].mxu0 %v196
    %v333 = vpop.f32.mrb[0].mxu0
    %v334 = vadd.f32 %v141, %v333
    %v335 = vpop.f32.mrb[0].mxu0
    %336 = vmatprep.mubr.f32.mxu0 0.0
    %337 = vmatmul.mubr.f32.gmra.mrb[0].mxu0 %v199
    %v338 = vpop.f32.mrb[0].mxu0
    %v339 = vadd.f32 %v146, %v338
    %v340 = vpop.f32.mrb[0].mxu0
    %341 = vmatprep.mubr.f32.mxu0 0.0
    %342 = vmatmul.mubr.f32.gmra.mrb[0].mxu0 %v202
    %v343 = vpop.f32.mrb[0].mxu0
    %v344 = vadd.f32 %v151, %v343
    %v345 = vpop.f32.mrb[0].mxu0
    %346 = vmatprep.mubr.f32.mxu0 0.0
    %347 = vmatmul.mubr.f32.gmra.mrb[0].mxu0 %v205
    %v348 = vpop.f32.mrb[0].mxu0
    %v349 = vadd.f32 %v156, %v348
    %v350 = vpop.f32.mrb[0].mxu0
    %351 = vdwg.mxu0
    %v352 = vtanh.pop %v274
    %v353 = vtanh.pop %v279
    %v354 = vtanh.pop %v284
    %v355 = vtanh.pop %v289
    %v356 = vtanh.pop %v294
    %v357 = vtanh.pop %v299
    %v358 = vtanh.pop %v304
    %v359 = vtanh.pop %v309
    %v360 = vtanh.pop %v314
    %v361 = vtanh.pop %v319
    %v362 = vtanh.pop %v324
    %v363 = vtanh.pop %v329
    %v364 = vtanh.pop %v334
    %v365 = vtanh.pop %v339
    %v366 = vtanh.pop %v344
    %v367 = vtanh.pop %v349
    %v368 = vld [vmem:[%s2] sm:$0xff]
    %v369 = vld [vmem:[%s2 + $0x8] sm:$0xff]
    %v370 = vld [vmem:[%s2 + $0x10] sm:$0xff]
    %v371 = vld [vmem:[%s2 + $0x18] sm:$0xff]
    %v372 = vld [vmem:[%s2 + $0x20] sm:$0xff]
    %v373 = vld [vmem:[%s2 + $0x28] sm:$0xff]
    %v374 = vld [vmem:[%s2 + $0x30] sm:$0xff]
    %v375 = vld [vmem:[%s2 + $0x38] sm:$0xff]
    %v376 = vld [vmem:[%s2 + $0x40] sm:$0xff]
    %v377 = vld [vmem:[%s2 + $0x48] sm:$0xff]
    %v378 = vld [vmem:[%s2 + $0x50] sm:$0xff]
    %v379 = vld [vmem:[%s2 + $0x58] sm:$0xff]
    %v380 = vld [vmem:[%s2 + $0x60] sm:$0xff]
    %v381 = vld [vmem:[%s2 + $0x68] sm:$0xff]
    %v382 = vld [vmem:[%s2 + $0x70] sm:$0xff]
    %v383 = vld [vmem:[%s2 + $0x78] sm:$0xff]
    %v384 = vld [vmem:[%s8] sm:$0xff]
    %v385 = vld [vmem:[%s8 + $0x8] sm:$0xff]
    %v386 = vld [vmem:[%s8 + $0x10] sm:$0xff]
    %v387 = vld [vmem:[%s8 + $0x18] sm:$0xff]
    %v388 = vld [vmem:[%s8 + $0x20] sm:$0xff]
    %v389 = vld [vmem:[%s8 + $0x28] sm:$0xff]
    %v390 = vld [vmem:[%s8 + $0x30] sm:$0xff]
    %v391 = vld [vmem:[%s8 + $0x38] sm:$0xff]
    %v392 = vld [vmem:[%s8 + $0x40] sm:$0xff]
    %v393 = vld [vmem:[%s8 + $0x48] sm:$0xff]
    %v394 = vld [vmem:[%s8 + $0x50] sm:$0xff]
    %v395 = vld [vmem:[%s8 + $0x58] sm:$0xff]
    %v396 = vld [vmem:[%s8 + $0x60] sm:$0xff]
    %v397 = vld [vmem:[%s8 + $0x68] sm:$0xff]
    %v398 = vld [vmem:[%s8 + $0x70] sm:$0xff]
    %v399 = vld [vmem:[%s8 + $0x78] sm:$0xff]
    %401 = vset.pattern.permute.xlu0 0
    %402 = vperm.xlu0 %401, %v384
    %v403 = vpop.permute.xlu0 %402
    %406 = vset.pattern.permute.xlu0 0
    %407 = vperm.xlu0 %406, %v385
    %v408 = vpop.permute.xlu0 %407
    %411 = vset.pattern.permute.xlu0 0
    %412 = vperm.xlu0 %411, %v386
    %v413 = vpop.permute.xlu0 %412
    %416 = vset.pattern.permute.xlu0 0
    %417 = vperm.xlu0 %416, %v387
    %v418 = vpop.permute.xlu0 %417
    %421 = vset.pattern.permute.xlu0 0
    %422 = vperm.xlu0 %421, %v388
    %v423 = vpop.permute.xlu0 %422
    %426 = vset.pattern.permute.xlu0 0
    %427 = vperm.xlu0 %426, %v389
    %v428 = vpop.permute.xlu0 %427
    %431 = vset.pattern.permute.xlu0 0
    %432 = vperm.xlu0 %431, %v390
    %v433 = vpop.permute.xlu0 %432
    %436 = vset.pattern.permute.xlu0 0
    %437 = vperm.xlu0 %436, %v391
    %v438 = vpop.permute.xlu0 %437
    %441 = vset.pattern.permute.xlu0 0
    %442 = vperm.xlu0 %441, %v392
    %v443 = vpop.permute.xlu0 %442
    %446 = vset.pattern.permute.xlu0 0
    %447 = vperm.xlu0 %446, %v393
    %v448 = vpop.permute.xlu0 %447
    %451 = vset.pattern.permute.xlu0 0
    %452 = vperm.xlu0 %451, %v394
    %v453 = vpop.permute.xlu0 %452
    %456 = vset.pattern.permute.xlu0 0
    %457 = vperm.xlu0 %456, %v395
    %v458 = vpop.permute.xlu0 %457
    %461 = vset.pattern.permute.xlu0 0
    %462 = vperm.xlu0 %461, %v396
    %v463 = vpop.permute.xlu0 %462
    %466 = vset.pattern.permute.xlu0 0
    %467 = vperm.xlu0 %466, %v397
    %v468 = vpop.permute.xlu0 %467
    %471 = vset.pattern.permute.xlu0 0
    %472 = vperm.xlu0 %471, %v398
    %v473 = vpop.permute.xlu0 %472
    %476 = vset.pattern.permute.xlu0 0
    %477 = vperm.xlu0 %476, %v399
    %v478 = vpop.permute.xlu0 %477
    %480 = vmatprep.subr.mxu0 0.0
    %481 = vmatpush1.msra.mxu0 %v352
    %482 = vmatprep.subr.mxu0 0.0
    %483 = vmatpush1.msra.mxu0 %v353
    %484 = vmatprep.subr.mxu0 0.0
    %485 = vmatpush1.msra.mxu0 %v354
    %486 = vmatprep.subr.mxu0 0.0
    %487 = vmatpush1.msra.mxu0 %v355
    %488 = vmatprep.subr.mxu0 0.0
    %489 = vmatpush1.msra.mxu0 %v356
    %490 = vmatprep.subr.mxu0 0.0
    %491 = vmatpush1.msra.mxu0 %v357
    %492 = vmatprep.subr.mxu0 0.0
    %493 = vmatpush1.msra.mxu0 %v358
    %494 = vmatprep.subr.mxu0 0.0
    %495 = vmatpush1.msra.mxu0 %v359
    %496 = vmatprep.subr.mxu0 0.0
    %497 = vmatpush1.msra.mxu0 %v360
    %498 = vmatprep.subr.mxu0 0.0
    %499 = vmatpush1.msra.mxu0 %v361
    %500 = vmatprep.subr.mxu0 0.0
    %501 = vmatpush1.msra.mxu0 %v362
    %502 = vmatprep.subr.mxu0 0.0
    %503 = vmatpush1.msra.mxu0 %v363
    %504 = vmatprep.subr.mxu0 0.0
    %505 = vmatpush1.msra.mxu0 %v364
    %506 = vmatprep.subr.mxu0 0.0
    %507 = vmatpush1.msra.mxu0 %v365
    %508 = vmatprep.subr.mxu0 0.0
    %509 = vmatpush1.msra.mxu0 %v366
    %510 = vmatprep.subr.mxu0 0.0
    %511 = vmatpush1.msra.mxu0 %v367
    %512 = vmatprep.subr.mxu0 0.0
    %513 = vmatpush1.msra.mxu0 0.0
    %514 = vmatprep.subr.mxu0 0.0
    %515 = vmatpush1.msra.mxu0 0.0
    %516 = vmatprep.subr.mxu0 0.0
    %517 = vmatpush1.msra.mxu0 0.0
    %518 = vmatprep.subr.mxu0 0.0
    %519 = vmatpush1.msra.mxu0 0.0
    %520 = vmatprep.subr.mxu0 0.0
    %521 = vmatpush1.msra.mxu0 0.0
    %522 = vmatprep.subr.mxu0 0.0
    %523 = vmatpush1.msra.mxu0 0.0
    %524 = vmatprep.subr.mxu0 0.0
    %525 = vmatpush1.msra.mxu0 0.0
    %526 = vmatprep.subr.mxu0 0.0
    %527 = vmatpush1.msra.mxu0 0.0
    %528 = vmatprep.subr.mxu0 0.0
    %529 = vmatpush1.msra.mxu0 0.0
    %530 = vmatprep.subr.mxu0 0.0
    %531 = vmatpush1.msra.mxu0 0.0
    %532 = vmatprep.subr.mxu0 0.0
    %533 = vmatpush1.msra.mxu0 0.0
    %534 = vmatprep.subr.mxu0 0.0
    %535 = vmatpush1.msra.mxu0 0.0
    %536 = vmatprep.subr.mxu0 0.0
    %537 = vmatpush1.msra.mxu0 0.0
    %538 = vmatprep.subr.mxu0 0.0
    %539 = vmatpush1.msra.mxu0 0.0
    %540 = vmatprep.subr.mxu0 0.0
    %541 = vmatpush1.msra.mxu0 0.0
    %542 = vmatprep.subr.mxu0 0.0
    %543 = vmatpush1.msra.mxu0 0.0
    %544 = vmatprep.mubr.f32.mxu0 0.0
    %545 = vmatmul.mubr.f32.gmra.mrb[0].mxu0 %v368
    %v546 = vpop.f32.mrb[0].mxu0
    %v547 = vadd.f32 %v403, %v546
    %v548 = vpop.f32.mrb[0].mxu0
    %549 = vmatprep.mubr.f32.mxu0 0.0
    %550 = vmatmul.mubr.f32.gmra.mrb[0].mxu0 %v369
    %v551 = vpop.f32.mrb[0].mxu0
    %v552 = vadd.f32 %v408, %v551
    %v553 = vpop.f32.mrb[0].mxu0
    %554 = vmatprep.mubr.f32.mxu0 0.0
    %555 = vmatmul.mubr.f32.gmra.mrb[0].mxu0 %v370
    %v556 = vpop.f32.mrb[0].mxu0
    %v557 = vadd.f32 %v413, %v556
    %v558 = vpop.f32.mrb[0].mxu0
    %559 = vmatprep.mubr.f32.mxu0 0.0
    %560 = vmatmul.mubr.f32.gmra.mrb[0].mxu0 %v371
    %v561 = vpop.f32.mrb[0].mxu0
    %v562 = vadd.f32 %v418, %v561
    %v563 = vpop.f32.mrb[0].mxu0
    %564 = vmatprep.mubr.f32.mxu0 0.0
    %565 = vmatmul.mubr.f32.gmra.mrb[0].mxu0 %v372
    %v566 = vpop.f32.mrb[0].mxu0
    %v567 = vadd.f32 %v423, %v566
    %v568 = vpop.f32.mrb[0].mxu0
    %569 = vmatprep.mubr.f32.mxu0 0.0
    %570 = vmatmul.mubr.f32.gmra.mrb[0].mxu0 %v373
    %v571 = vpop.f32.mrb[0].mxu0
    %v572 = vadd.f32 %v428, %v571
    %v573 = vpop.f32.mrb[0].mxu0
    %574 = vmatprep.mubr.f32.mxu0 0.0
    %575 = vmatmul.mubr.f32.gmra.mrb[0].mxu0 %v374
    %v576 = vpop.f32.mrb[0].mxu0
    %v577 = vadd.f32 %v433, %v576
    %v578 = vpop.f32.mrb[0].mxu0
    %579 = vmatprep.mubr.f32.mxu0 0.0
    %580 = vmatmul.mubr.f32.gmra.mrb[0].mxu0 %v375
    %v581 = vpop.f32.mrb[0].mxu0
    %v582 = vadd.f32 %v438, %v581
    %v583 = vpop.f32.mrb[0].mxu0
    %584 = vmatprep.mubr.f32.mxu0 0.0
    %585 = vmatmul.mubr.f32.gmra.mrb[0].mxu0 %v376
    %v586 = vpop.f32.mrb[0].mxu0
    %v587 = vadd.f32 %v443, %v586
    %v588 = vpop.f32.mrb[0].mxu0
    %589 = vmatprep.mubr.f32.mxu0 0.0
    %590 = vmatmul.mubr.f32.gmra.mrb[0].mxu0 %v377
    %v591 = vpop.f32.mrb[0].mxu0
    %v592 = vadd.f32 %v448, %v591
    %v593 = vpop.f32.mrb[0].mxu0
    %594 = vmatprep.mubr.f32.mxu0 0.0
    %595 = vmatmul.mubr.f32.gmra.mrb[0].mxu0 %v378
    %v596 = vpop.f32.mrb[0].mxu0
    %v597 = vadd.f32 %v453, %v596
    %v598 = vpop.f32.mrb[0].mxu0
    %599 = vmatprep.mubr.f32.mxu0 0.0
    %600 = vmatmul.mubr.f32.gmra.mrb[0].mxu0 %v379
    %v601 = vpop.f32.mrb[0].mxu0
    %v602 = vadd.f32 %v458, %v601
    %v603 = vpop.f32.mrb[0].mxu0
    %604 = vmatprep.mubr.f32.mxu0 0.0
    %605 = vmatmul.mubr.f32.gmra.mrb[0].mxu0 %v380
    %v606 = vpop.f32.mrb[0].mxu0
    %v607 = vadd.f32 %v463, %v606
    %v608 = vpop.f32.mrb[0].mxu0
    %609 = vmatprep.mubr.f32.mxu0 0.0
    %610 = vmatmul.mubr.f32.gmra.mrb[0].mxu0 %v381
    %v611 = vpop.f32.mrb[0].mxu0
    %v612 = vadd.f32 %v468, %v611
    %v613 = vpop.f32.mrb[0].mxu0
    %614 = vmatprep.mubr.f32.mxu0 0.0
    %615 = vmatmul.mubr.f32.gmra.mrb[0].mxu0 %v382
    %v616 = vpop.f32.mrb[0].mxu0
    %v617 = vadd.f32 %v473, %v616
    %v618 = vpop.f32.mrb[0].mxu0
    %619 = vmatprep.mubr.f32.mxu0 0.0
    %620 = vmatmul.mubr.f32.gmra.mrb[0].mxu0 %v383
    %v621 = vpop.f32.mrb[0].mxu0
    %v622 = vadd.f32 %v478, %v621
    %v623 = vpop.f32.mrb[0].mxu0
    %624 = vdwg.mxu0
    %v625 = vtanh.pop %v547
    %v626 = vtanh.pop %v552
    %v627 = vtanh.pop %v557
    %v628 = vtanh.pop %v562
    %v629 = vtanh.pop %v567
    %v630 = vtanh.pop %v572
    %v631 = vtanh.pop %v577
    %v632 = vtanh.pop %v582
    %v633 = vtanh.pop %v587
    %v634 = vtanh.pop %v592
    %v635 = vtanh.pop %v597
    %v636 = vtanh.pop %v602
    %v637 = vtanh.pop %v607
    %v638 = vtanh.pop %v612
    %v639 = vtanh.pop %v617
    %v640 = vtanh.pop %v622
    %v641 = vld [vmem:[%s3] sm:$0xff]
    %v642 = vld [vmem:[%s3 + $0x8] sm:$0xff]
    %v643 = vld [vmem:[%s3 + $0x10] sm:$0xff]
    %v644 = vld [vmem:[%s3 + $0x18] sm:$0xff]
    %v645 = vld [vmem:[%s3 + $0x20] sm:$0xff]
    %v646 = vld [vmem:[%s3 + $0x28] sm:$0xff]
    %v647 = vld [vmem:[%s3 + $0x30] sm:$0xff]
    %v648 = vld [vmem:[%s3 + $0x38] sm:$0xff]
    %v649 = vld [vmem:[%s3 + $0x40] sm:$0xff]
    %v650 = vld [vmem:[%s3 + $0x48] sm:$0xff]
    %v651 = vld [vmem:[%s3 + $0x50] sm:$0xff]
    %v652 = vld [vmem:[%s3 + $0x58] sm:$0xff]
    %v653 = vld [vmem:[%s3 + $0x60] sm:$0xff]
    %v654 = vld [vmem:[%s3 + $0x68] sm:$0xff]
    %v655 = vld [vmem:[%s3 + $0x70] sm:$0xff]
    %v656 = vld [vmem:[%s3 + $0x78] sm:$0xff]
    %v657 = vld [vmem:[%s3 + $0x80] sm:$0xff]
    %v658 = vld [vmem:[%s3 + $0x88] sm:$0xff]
    %v659 = vld [vmem:[%s3 + $0x90] sm:$0xff]
    %v660 = vld [vmem:[%s3 + $0x98] sm:$0xff]
    %v661 = vld [vmem:[%s3 + $0xa0] sm:$0xff]
    %v662 = vld [vmem:[%s3 + $0xa8] sm:$0xff]
    %v663 = vld [vmem:[%s3 + $0xb0] sm:$0xff]
    %v664 = vld [vmem:[%s3 + $0xb8] sm:$0xff]
    %v665 = vld [vmem:[%s3 + $0xc0] sm:$0xff]
    %v666 = vld [vmem:[%s3 + $0xc8] sm:$0xff]
    %v667 = vld [vmem:[%s3 + $0xd0] sm:$0xff]
    %v668 = vld [vmem:[%s3 + $0xd8] sm:$0xff]
    %v669 = vld [vmem:[%s3 + $0xe0] sm:$0xff]
    %v670 = vld [vmem:[%s3 + $0xe8] sm:$0xff]
    %v671 = vld [vmem:[%s3 + $0xf0] sm:$0xff]
    %v672 = vld [vmem:[%s3 + $0xf8] sm:$0xff]
    %v673 = vld [vmem:[%s9] sm:$0xff]
    %v674 = vld [vmem:[%s9 + $0x8] sm:$0xff]
    %v675 = vld [vmem:[%s9 + $0x10] sm:$0xff]
    %v676 = vld [vmem:[%s9 + $0x18] sm:$0xff]
    %v677 = vld [vmem:[%s9 + $0x20] sm:$0xff]
    %v678 = vld [vmem:[%s9 + $0x28] sm:$0xff]
    %v679 = vld [vmem:[%s9 + $0x30] sm:$0xff]
    %v680 = vld [vmem:[%s9 + $0x38] sm:$0xff]
    %v681 = vld [vmem:[%s9 + $0x40] sm:$0xff]
    %v682 = vld [vmem:[%s9 + $0x48] sm:$0xff]
    %v683 = vld [vmem:[%s9 + $0x50] sm:$0xff]
    %v684 = vld [vmem:[%s9 + $0x58] sm:$0xff]
    %v685 = vld [vmem:[%s9 + $0x60] sm:$0xff]
    %v686 = vld [vmem:[%s9 + $0x68] sm:$0xff]
    %v687 = vld [vmem:[%s9 + $0x70] sm:$0xff]
    %v688 = vld [vmem:[%s9 + $0x78] sm:$0xff]
    %v689 = vld [vmem:[%s9 + $0x80] sm:$0xff]
    %v690 = vld [vmem:[%s9 + $0x88] sm:$0xff]
    %v691 = vld [vmem:[%s9 + $0x90] sm:$0xff]
    %v692 = vld [vmem:[%s9 + $0x98] sm:$0xff]
    %v693 = vld [vmem:[%s9 + $0xa0] sm:$0xff]
    %v694 = vld [vmem:[%s9 + $0xa8] sm:$0xff]
    %v695 = vld [vmem:[%s9 + $0xb0] sm:$0xff]
    %v696 = vld [vmem:[%s9 + $0xb8] sm:$0xff]
    %v697 = vld [vmem:[%s9 + $0xc0] sm:$0xff]
    %v698 = vld [vmem:[%s9 + $0xc8] sm:$0xff]
    %v699 = vld [vmem:[%s9 + $0xd0] sm:$0xff]
    %v700 = vld [vmem:[%s9 + $0xd8] sm:$0xff]
    %v701 = vld [vmem:[%s9 + $0xe0] sm:$0xff]
    %v702 = vld [vmem:[%s9 + $0xe8] sm:$0xff]
    %v703 = vld [vmem:[%s9 + $0xf0] sm:$0xff]
    %v704 = vld [vmem:[%s9 + $0xf8] sm:$0xff]
    %706 = vset.pattern.permute.xlu0 0
    %707 = vperm.xlu0 %706, %v673
    %v708 = vpop.permute.xlu0 %707
    %711 = vset.pattern.permute.xlu0 0
    %712 = vperm.xlu0 %711, %v674
    %v713 = vpop.permute.xlu0 %712
    %716 = vset.pattern.permute.xlu0 0
    %717 = vperm.xlu0 %716, %v675
    %v718 = vpop.permute.xlu0 %717
    %721 = vset.pattern.permute.xlu0 0
    %722 = vperm.xlu0 %721, %v676
    %v723 = vpop.permute.xlu0 %722
    %726 = vset.pattern.permute.xlu0 0
    %727 = vperm.xlu0 %726, %v677
    %v728 = vpop.permute.xlu0 %727
    %731 = vset.pattern.permute.xlu0 0
    %732 = vperm.xlu0 %731, %v678
    %v733 = vpop.permute.xlu0 %732
    %736 = vset.pattern.permute.xlu0 0
    %737 = vperm.xlu0 %736, %v679
    %v738 = vpop.permute.xlu0 %737
    %741 = vset.pattern.permute.xlu0 0
    %742 = vperm.xlu0 %741, %v680
    %v743 = vpop.permute.xlu0 %742
    %746 = vset.pattern.permute.xlu0 0
    %747 = vperm.xlu0 %746, %v681
    %v748 = vpop.permute.xlu0 %747
    %751 = vset.pattern.permute.xlu0 0
    %752 = vperm.xlu0 %751, %v682
    %v753 = vpop.permute.xlu0 %752
    %756 = vset.pattern.permute.xlu0 0
    %757 = vperm.xlu0 %756, %v683
    %v758 = vpop.permute.xlu0 %757
    %761 = vset.pattern.permute.xlu0 0
    %762 = vperm.xlu0 %761, %v684
    %v763 = vpop.permute.xlu0 %762
    %766 = vset.pattern.permute.xlu0 0
    %767 = vperm.xlu0 %766, %v685
    %v768 = vpop.permute.xlu0 %767
    %771 = vset.pattern.permute.xlu0 0
    %772 = vperm.xlu0 %771, %v686
    %v773 = vpop.permute.xlu0 %772
    %776 = vset.pattern.permute.xlu0 0
    %777 = vperm.xlu0 %776, %v687
    %v778 = vpop.permute.xlu0 %777
    %781 = vset.pattern.permute.xlu0 0
    %782 = vperm.xlu0 %781, %v688
    %v783 = vpop.permute.xlu0 %782
    %786 = vset.pattern.permute.xlu0 0
    %787 = vperm.xlu0 %786, %v689
    %v788 = vpop.permute.xlu0 %787
    %791 = vset.pattern.permute.xlu0 0
    %792 = vperm.xlu0 %791, %v690
    %v793 = vpop.permute.xlu0 %792
    %796 = vset.pattern.permute.xlu0 0
    %797 = vperm.xlu0 %796, %v691
    %v798 = vpop.permute.xlu0 %797
    %801 = vset.pattern.permute.xlu0 0
    %802 = vperm.xlu0 %801, %v692
    %v803 = vpop.permute.xlu0 %802
    %806 = vset.pattern.permute.xlu0 0
    %807 = vperm.xlu0 %806, %v693
    %v808 = vpop.permute.xlu0 %807
    %811 = vset.pattern.permute.xlu0 0
    %812 = vperm.xlu0 %811, %v694
    %v813 = vpop.permute.xlu0 %812
    %816 = vset.pattern.permute.xlu0 0
    %817 = vperm.xlu0 %816, %v695
    %v818 = vpop.permute.xlu0 %817
    %821 = vset.pattern.permute.xlu0 0
    %822 = vperm.xlu0 %821, %v696
    %v823 = vpop.permute.xlu0 %822
    %826 = vset.pattern.permute.xlu0 0
    %827 = vperm.xlu0 %826, %v697
    %v828 = vpop.permute.xlu0 %827
    %831 = vset.pattern.permute.xlu0 0
    %832 = vperm.xlu0 %831, %v698
    %v833 = vpop.permute.xlu0 %832
    %836 = vset.pattern.permute.xlu0 0
    %837 = vperm.xlu0 %836, %v699
    %v838 = vpop.permute.xlu0 %837
    %841 = vset.pattern.permute.xlu0 0
    %842 = vperm.xlu0 %841, %v700
    %v843 = vpop.permute.xlu0 %842
    %846 = vset.pattern.permute.xlu0 0
    %847 = vperm.xlu0 %846, %v701
    %v848 = vpop.permute.xlu0 %847
    %851 = vset.pattern.permute.xlu0 0
    %852 = vperm.xlu0 %851, %v702
    %v853 = vpop.permute.xlu0 %852
    %856 = vset.pattern.permute.xlu0 0
    %857 = vperm.xlu0 %856, %v703
    %v858 = vpop.permute.xlu0 %857
    %861 = vset.pattern.permute.xlu0 0
    %862 = vperm.xlu0 %861, %v704
    %v863 = vpop.permute.xlu0 %862
    %865 = vmatprep.subr.mxu0 0.0
    %866 = vmatpush1.msra.mxu0 %v625
    %867 = vmatprep.subr.mxu0 0.0
    %868 = vmatpush1.msra.mxu0 %v626
    %869 = vmatprep.subr.mxu0 0.0
    %870 = vmatpush1.msra.mxu0 %v627
    %871 = vmatprep.subr.mxu0 0.0
    %872 = vmatpush1.msra.mxu0 %v628
    %873 = vmatprep.subr.mxu0 0.0
    %874 = vmatpush1.msra.mxu0 %v629
    %875 = vmatprep.subr.mxu0 0.0
    %876 = vmatpush1.msra.mxu0 %v630
    %877 = vmatprep.subr.mxu0 0.0
    %878 = vmatpush1.msra.mxu0 %v631
    %879 = vmatprep.subr.mxu0 0.0
    %880 = vmatpush1.msra.mxu0 %v632
    %881 = vmatprep.subr.mxu0 0.0
    %882 = vmatpush1.msra.mxu0 %v633
    %883 = vmatprep.subr.mxu0 0.0
    %884 = vmatpush1.msra.mxu0 %v634
    %885 = vmatprep.subr.mxu0 0.0
    %886 = vmatpush1.msra.mxu0 %v635
    %887 = vmatprep.subr.mxu0 0.0
    %888 = vmatpush1.msra.mxu0 %v636
    %889 = vmatprep.subr.mxu0 0.0
    %890 = vmatpush1.msra.mxu0 %v637
    %891 = vmatprep.subr.mxu0 0.0
    %892 = vmatpush1.msra.mxu0 %v638
    %893 = vmatprep.subr.mxu0 0.0
    %894 = vmatpush1.msra.mxu0 %v639
    %895 = vmatprep.subr.mxu0 0.0
    %896 = vmatpush1.msra.mxu0 %v640
    %897 = vmatprep.subr.mxu0 0.0
    %898 = vmatpush1.msra.mxu0 0.0
    %899 = vmatprep.subr.mxu0 0.0
    %900 = vmatpush1.msra.mxu0 0.0
    %901 = vmatprep.subr.mxu0 0.0
    %902 = vmatpush1.msra.mxu0 0.0
    %903 = vmatprep.subr.mxu0 0.0
    %904 = vmatpush1.msra.mxu0 0.0
    %905 = vmatprep.subr.mxu0 0.0
    %906 = vmatpush1.msra.mxu0 0.0
    %907 = vmatprep.subr.mxu0 0.0
    %908 = vmatpush1.msra.mxu0 0.0
    %909 = vmatprep.subr.mxu0 0.0
    %910 = vmatpush1.msra.mxu0 0.0
    %911 = vmatprep.subr.mxu0 0.0
    %912 = vmatpush1.msra.mxu0 0.0
    %913 = vmatprep.subr.mxu0 0.0
    %914 = vmatpush1.msra.mxu0 0.0
    %915 = vmatprep.subr.mxu0 0.0
    %916 = vmatpush1.msra.mxu0 0.0
    %917 = vmatprep.subr.mxu0 0.0
    %918 = vmatpush1.msra.mxu0 0.0
    %919 = vmatprep.subr.mxu0 0.0
    %920 = vmatpush1.msra.mxu0 0.0
    %921 = vmatprep.subr.mxu0 0.0
    %922 = vmatpush1.msra.mxu0 0.0
    %923 = vmatprep.subr.mxu0 0.0
    %924 = vmatpush1.msra.mxu0 0.0
    %925 = vmatprep.subr.mxu0 0.0
    %926 = vmatpush1.msra.mxu0 0.0
    %927 = vmatprep.subr.mxu0 0.0
    %928 = vmatpush1.msra.mxu0 0.0
    %929 = vmatprep.mubr.f32.mxu0 0.0
    %930 = vmatmul.mubr.f32.gmra.mrb[0].mxu0 %v641
    %v931 = vpop.f32.mrb[0].mxu0
    %v932 = vadd.f32 %v708, %v931
    %v933 = vpop.f32.mrb[0].mxu0
    %934 = vmatprep.mubr.f32.mxu0 0.0
    %935 = vmatmul.mubr.f32.gmra.mrb[0].mxu0 %v642
    %v936 = vpop.f32.mrb[0].mxu0
    %v937 = vadd.f32 %v713, %v936
    %v938 = vpop.f32.mrb[0].mxu0
    %939 = vmatprep.mubr.f32.mxu0 0.0
    %940 = vmatmul.mubr.f32.gmra.mrb[0].mxu0 %v643
    %v941 = vpop.f32.mrb[0].mxu0
    %v942 = vadd.f32 %v718, %v941
    %v943 = vpop.f32.mrb[0].mxu0
    %944 = vmatprep.mubr.f32.mxu0 0.0
    %945 = vmatmul.mubr.f32.gmra.mrb[0].mxu0 %v644
    %v946 = vpop.f32.mrb[0].mxu0
    %v947 = vadd.f32 %v723, %v946
    %v948 = vpop.f32.mrb[0].mxu0
    %949 = vmatprep.mubr.f32.mxu0 0.0
    %950 = vmatmul.mubr.f32.gmra.mrb[0].mxu0 %v645
    %v951 = vpop.f32.mrb[0].mxu0
    %v952 = vadd.f32 %v728, %v951
    %v953 = vpop.f32.mrb[0].mxu0
    %954 = vmatprep.mubr.f32.mxu0 0.0
    %955 = vmatmul.mubr.f32.gmra.mrb[0].mxu0 %v646
    %v956 = vpop.f32.mrb[0].mxu0
    %v957 = vadd.f32 %v733, %v956
    %v958 = vpop.f32.mrb[0].mxu0
    %959 = vmatprep.mubr.f32.mxu0 0.0
    %960 = vmatmul.mubr.f32.gmra.mrb[0].mxu0 %v647
    %v961 = vpop.f32.mrb[0].mxu0
    %v962 = vadd.f32 %v738, %v961
    %v963 = vpop.f32.mrb[0].mxu0
    %964 = vmatprep.mubr.f32.mxu0 0.0
    %965 = vmatmul.mubr.f32.gmra.mrb[0].mxu0 %v648
    %v966 = vpop.f32.mrb[0].mxu0
    %v967 = vadd.f32 %v743, %v966
    %v968 = vpop.f32.mrb[0].mxu0
    %969 = vmatprep.mubr.f32.mxu0 0.0
    %970 = vmatmul.mubr.f32.gmra.mrb[0].mxu0 %v649
    %v971 = vpop.f32.mrb[0].mxu0
    %v972 = vadd.f32 %v748, %v971
    %v973 = vpop.f32.mrb[0].mxu0
    %974 = vmatprep.mubr.f32.mxu0 0.0
    %975 = vmatmul.mubr.f32.gmra.mrb[0].mxu0 %v650
    %v976 = vpop.f32.mrb[0].mxu0
    %v977 = vadd.f32 %v753, %v976
    %v978 = vpop.f32.mrb[0].mxu0
    %979 = vmatprep.mubr.f32.mxu0 0.0
    %980 = vmatmul.mubr.f32.gmra.mrb[0].mxu0 %v651
    %v981 = vpop.f32.mrb[0].mxu0
    %v982 = vadd.f32 %v758, %v981
    %v983 = vpop.f32.mrb[0].mxu0
    %984 = vmatprep.mubr.f32.mxu0 0.0
    %985 = vmatmul.mubr.f32.gmra.mrb[0].mxu0 %v652
    %v986 = vpop.f32.mrb[0].mxu0
    %v987 = vadd.f32 %v763, %v986
    %v988 = vpop.f32.mrb[0].mxu0
    %989 = vmatprep.mubr.f32.mxu0 0.0
    %990 = vmatmul.mubr.f32.gmra.mrb[0].mxu0 %v653
    %v991 = vpop.f32.mrb[0].mxu0
    %v992 = vadd.f32 %v768, %v991
    %v993 = vpop.f32.mrb[0].mxu0
    %994 = vmatprep.mubr.f32.mxu0 0.0
    %995 = vmatmul.mubr.f32.gmra.mrb[0].mxu0 %v654
    %v996 = vpop.f32.mrb[0].mxu0
    %v997 = vadd.f32 %v773, %v996
    %v998 = vpop.f32.mrb[0].mxu0
    %999 = vmatprep.mubr.f32.mxu0 0.0
    %1000 = vmatmul.mubr.f32.gmra.mrb[0].mxu0 %v655
    %v1001 = vpop.f32.mrb[0].mxu0
    %v1002 = vadd.f32 %v778, %v1001
    %v1003 = vpop.f32.mrb[0].mxu0
    %1004 = vmatprep.mubr.f32.mxu0 0.0
    %1005 = vmatmul.mubr.f32.gmra.mrb[0].mxu0 %v656
    %v1006 = vpop.f32.mrb[0].mxu0
    %v1007 = vadd.f32 %v783, %v1006
    %v1008 = vpop.f32.mrb[0].mxu0
    %1009 = vmatprep.mubr.f32.mxu0 0.0
    %1010 = vmatmul.mubr.f32.gmra.mrb[0].mxu0 %v657
    %v1011 = vpop.f32.mrb[0].mxu0
    %v1012 = vadd.f32 %v788, %v1011
    %v1013 = vpop.f32.mrb[0].mxu0
    %1014 = vmatprep.mubr.f32.mxu0 0.0
    %1015 = vmatmul.mubr.f32.gmra.mrb[0].mxu0 %v658
    %v1016 = vpop.f32.mrb[0].mxu0
    %v1017 = vadd.f32 %v793, %v1016
    %v1018 = vpop.f32.mrb[0].mxu0
    %1019 = vmatprep.mubr.f32.mxu0 0.0
    %1020 = vmatmul.mubr.f32.gmra.mrb[0].mxu0 %v659
    %v1021 = vpop.f32.mrb[0].mxu0
    %v1022 = vadd.f32 %v798, %v1021
    %v1023 = vpop.f32.mrb[0].mxu0
    %1024 = vmatprep.mubr.f32.mxu0 0.0
    %1025 = vmatmul.mubr.f32.gmra.mrb[0].mxu0 %v660
    %v1026 = vpop.f32.mrb[0].mxu0
    %v1027 = vadd.f32 %v803, %v1026
    %v1028 = vpop.f32.mrb[0].mxu0
    %1029 = vmatprep.mubr.f32.mxu0 0.0
    %1030 = vmatmul.mubr.f32.gmra.mrb[0].mxu0 %v661
    %v1031 = vpop.f32.mrb[0].mxu0
    %v1032 = vadd.f32 %v808, %v1031
    %v1033 = vpop.f32.mrb[0].mxu0
    %1034 = vmatprep.mubr.f32.mxu0 0.0
    %1035 = vmatmul.mubr.f32.gmra.mrb[0].mxu0 %v662
    %v1036 = vpop.f32.mrb[0].mxu0
    %v1037 = vadd.f32 %v813, %v1036
    %v1038 = vpop.f32.mrb[0].mxu0
    %1039 = vmatprep.mubr.f32.mxu0 0.0
    %1040 = vmatmul.mubr.f32.gmra.mrb[0].mxu0 %v663
    %v1041 = vpop.f32.mrb[0].mxu0
    %v1042 = vadd.f32 %v818, %v1041
    %v1043 = vpop.f32.mrb[0].mxu0
    %1044 = vmatprep.mubr.f32.mxu0 0.0
    %1045 = vmatmul.mubr.f32.gmra.mrb[0].mxu0 %v664
    %v1046 = vpop.f32.mrb[0].mxu0
    %v1047 = vadd.f32 %v823, %v1046
    %v1048 = vpop.f32.mrb[0].mxu0
    %1049 = vmatprep.mubr.f32.mxu0 0.0
    %1050 = vmatmul.mubr.f32.gmra.mrb[0].mxu0 %v665
    %v1051 = vpop.f32.mrb[0].mxu0
    %v1052 = vadd.f32 %v828, %v1051
    %v1053 = vpop.f32.mrb[0].mxu0
    %1054 = vmatprep.mubr.f32.mxu0 0.0
    %1055 = vmatmul.mubr.f32.gmra.mrb[0].mxu0 %v666
    %v1056 = vpop.f32.mrb[0].mxu0
    %v1057 = vadd.f32 %v833, %v1056
    %v1058 = vpop.f32.mrb[0].mxu0
    %1059 = vmatprep.mubr.f32.mxu0 0.0
    %1060 = vmatmul.mubr.f32.gmra.mrb[0].mxu0 %v667
    %v1061 = vpop.f32.mrb[0].mxu0
    %v1062 = vadd.f32 %v838, %v1061
    %v1063 = vpop.f32.mrb[0].mxu0
    %1064 = vmatprep.mubr.f32.mxu0 0.0
    %1065 = vmatmul.mubr.f32.gmra.mrb[0].mxu0 %v668
    %v1066 = vpop.f32.mrb[0].mxu0
    %v1067 = vadd.f32 %v843, %v1066
    %v1068 = vpop.f32.mrb[0].mxu0
    %1069 = vmatprep.mubr.f32.mxu0 0.0
    %1070 = vmatmul.mubr.f32.gmra.mrb[0].mxu0 %v669
    %v1071 = vpop.f32.mrb[0].mxu0
    %v1072 = vadd.f32 %v848, %v1071
    %v1073 = vpop.f32.mrb[0].mxu0
    %1074 = vmatprep.mubr.f32.mxu0 0.0
    %1075 = vmatmul.mubr.f32.gmra.mrb[0].mxu0 %v670
    %v1076 = vpop.f32.mrb[0].mxu0
    %v1077 = vadd.f32 %v853, %v1076
    %v1078 = vpop.f32.mrb[0].mxu0
    %1079 = vmatprep.mubr.f32.mxu0 0.0
    %1080 = vmatmul.mubr.f32.gmra.mrb[0].mxu0 %v671
    %v1081 = vpop.f32.mrb[0].mxu0
    %v1082 = vadd.f32 %v858, %v1081
    %v1083 = vpop.f32.mrb[0].mxu0
    %1084 = vmatprep.mubr.f32.mxu0 0.0
    %1085 = vmatmul.mubr.f32.gmra.mrb[0].mxu0 %v672
    %v1086 = vpop.f32.mrb[0].mxu0
    %v1087 = vadd.f32 %v863, %v1086
    %v1088 = vpop.f32.mrb[0].mxu0
    %1089 = vdwg.mxu0
    %v1090 = vtanh.pop %v932
    %v1091 = vtanh.pop %v937
    %v1092 = vtanh.pop %v942
    %v1093 = vtanh.pop %v947
    %v1094 = vtanh.pop %v952
    %v1095 = vtanh.pop %v957
    %v1096 = vtanh.pop %v962
    %v1097 = vtanh.pop %v967
    %v1098 = vtanh.pop %v972
    %v1099 = vtanh.pop %v977
    %v1100 = vtanh.pop %v982
    %v1101 = vtanh.pop %v987
    %v1102 = vtanh.pop %v992
    %v1103 = vtanh.pop %v997
    %v1104 = vtanh.pop %v1002
    %v1105 = vtanh.pop %v1007
    %v1106 = vtanh.pop %v1012
    %v1107 = vtanh.pop %v1017
    %v1108 = vtanh.pop %v1022
    %v1109 = vtanh.pop %v1027
    %v1110 = vtanh.pop %v1032
    %v1111 = vtanh.pop %v1037
    %v1112 = vtanh.pop %v1042
    %v1113 = vtanh.pop %v1047
    %v1114 = vtanh.pop %v1052
    %v1115 = vtanh.pop %v1057
    %v1116 = vtanh.pop %v1062
    %v1117 = vtanh.pop %v1067
    %v1118 = vtanh.pop %v1072
    %v1119 = vtanh.pop %v1077
    %v1120 = vtanh.pop %v1082
    %v1121 = vtanh.pop %v1087
    %v1122 = vld [vmem:[%s4] sm:$0xff]
    %v1123 = vld [vmem:[%s4 + $0x8] sm:$0xff]
    %v1124 = vld [vmem:[%s4 + $0x10] sm:$0xff]
    %v1125 = vld [vmem:[%s4 + $0x18] sm:$0xff]
    %v1126 = vld [vmem:[%s4 + $0x20] sm:$0xff]
    %v1127 = vld [vmem:[%s4 + $0x28] sm:$0xff]
    %v1128 = vld [vmem:[%s4 + $0x30] sm:$0xff]
    %v1129 = vld [vmem:[%s4 + $0x38] sm:$0xff]
    %v1130 = vld [vmem:[%s4 + $0x40] sm:$0xff]
    %v1131 = vld [vmem:[%s4 + $0x48] sm:$0xff]
    %v1132 = vld [vmem:[%s4 + $0x50] sm:$0xff]
    %v1133 = vld [vmem:[%s4 + $0x58] sm:$0xff]
    %v1134 = vld [vmem:[%s4 + $0x60] sm:$0xff]
    %v1135 = vld [vmem:[%s4 + $0x68] sm:$0xff]
    %v1136 = vld [vmem:[%s4 + $0x70] sm:$0xff]
    %v1137 = vld [vmem:[%s4 + $0x78] sm:$0xff]
    %v1138 = vld [vmem:[%s4 + $0x80] sm:$0xff]
    %v1139 = vld [vmem:[%s4 + $0x88] sm:$0xff]
    %v1140 = vld [vmem:[%s4 + $0x90] sm:$0xff]
    %v1141 = vld [vmem:[%s4 + $0x98] sm:$0xff]
    %v1142 = vld [vmem:[%s4 + $0xa0] sm:$0xff]
    %v1143 = vld [vmem:[%s4 + $0xa8] sm:$0xff]
    %v1144 = vld [vmem:[%s4 + $0xb0] sm:$0xff]
    %v1145 = vld [vmem:[%s4 + $0xb8] sm:$0xff]
    %v1146 = vld [vmem:[%s4 + $0xc0] sm:$0xff]
    %v1147 = vld [vmem:[%s4 + $0xc8] sm:$0xff]
    %v1148 = vld [vmem:[%s4 + $0xd0] sm:$0xff]
    %v1149 = vld [vmem:[%s4 + $0xd8] sm:$0xff]
    %v1150 = vld [vmem:[%s4 + $0xe0] sm:$0xff]
    %v1151 = vld [vmem:[%s4 + $0xe8] sm:$0xff]
    %v1152 = vld [vmem:[%s4 + $0xf0] sm:$0xff]
    %v1153 = vld [vmem:[%s4 + $0xf8] sm:$0xff]
    %v1154 = vld [vmem:[%s10] sm:$0xff]
    %v1155 = vld [vmem:[%s10 + $0x8] sm:$0xff]
    %v1156 = vld [vmem:[%s10 + $0x10] sm:$0xff]
    %v1157 = vld [vmem:[%s10 + $0x18] sm:$0xff]
    %v1158 = vld [vmem:[%s10 + $0x20] sm:$0xff]
    %v1159 = vld [vmem:[%s10 + $0x28] sm:$0xff]
    %v1160 = vld [vmem:[%s10 + $0x30] sm:$0xff]
    %v1161 = vld [vmem:[%s10 + $0x38] sm:$0xff]
    %v1162 = vld [vmem:[%s10 + $0x40] sm:$0xff]
    %v1163 = vld [vmem:[%s10 + $0x48] sm:$0xff]
    %v1164 = vld [vmem:[%s10 + $0x50] sm:$0xff]
    %v1165 = vld [vmem:[%s10 + $0x58] sm:$0xff]
    %v1166 = vld [vmem:[%s10 + $0x60] sm:$0xff]
    %v1167 = vld [vmem:[%s10 + $0x68] sm:$0xff]
    %v1168 = vld [vmem:[%s10 + $0x70] sm:$0xff]
    %v1169 = vld [vmem:[%s10 + $0x78] sm:$0xff]
    %1171 = vset.pattern.permute.xlu0 0
    %1172 = vperm.xlu0 %1171, %v1154
    %v1173 = vpop.permute.xlu0 %1172
    %1176 = vset.pattern.permute.xlu0 0
    %1177 = vperm.xlu0 %1176, %v1155
    %v1178 = vpop.permute.xlu0 %1177
    %1181 = vset.pattern.permute.xlu0 0
    %1182 = vperm.xlu0 %1181, %v1156
    %v1183 = vpop.permute.xlu0 %1182
    %1186 = vset.pattern.permute.xlu0 0
    %1187 = vperm.xlu0 %1186, %v1157
    %v1188 = vpop.permute.xlu0 %1187
    %1191 = vset.pattern.permute.xlu0 0
    %1192 = vperm.xlu0 %1191, %v1158
    %v1193 = vpop.permute.xlu0 %1192
    %1196 = vset.pattern.permute.xlu0 0
    %1197 = vperm.xlu0 %1196, %v1159
    %v1198 = vpop.permute.xlu0 %1197
    %1201 = vset.pattern.permute.xlu0 0
    %1202 = vperm.xlu0 %1201, %v1160
    %v1203 = vpop.permute.xlu0 %1202
    %1206 = vset.pattern.permute.xlu0 0
    %1207 = vperm.xlu0 %1206, %v1161
    %v1208 = vpop.permute.xlu0 %1207
    %1211 = vset.pattern.permute.xlu0 0
    %1212 = vperm.xlu0 %1211, %v1162
    %v1213 = vpop.permute.xlu0 %1212
    %1216 = vset.pattern.permute.xlu0 0
    %1217 = vperm.xlu0 %1216, %v1163
    %v1218 = vpop.permute.xlu0 %1217
    %1221 = vset.pattern.permute.xlu0 0
    %1222 = vperm.xlu0 %1221, %v1164
    %v1223 = vpop.permute.xlu0 %1222
    %1226 = vset.pattern.permute.xlu0 0
    %1227 = vperm.xlu0 %1226, %v1165
    %v1228 = vpop.permute.xlu0 %1227
    %1231 = vset.pattern.permute.xlu0 0
    %1232 = vperm.xlu0 %1231, %v1166
    %v1233 = vpop.permute.xlu0 %1232
    %1236 = vset.pattern.permute.xlu0 0
    %1237 = vperm.xlu0 %1236, %v1167
    %v1238 = vpop.permute.xlu0 %1237
    %1241 = vset.pattern.permute.xlu0 0
    %1242 = vperm.xlu0 %1241, %v1168
    %v1243 = vpop.permute.xlu0 %1242
    %1246 = vset.pattern.permute.xlu0 0
    %1247 = vperm.xlu0 %1246, %v1169
    %v1248 = vpop.permute.xlu0 %1247
    %1250 = vmatprep.subr.mxu0 0.0
    %1251 = vmatpush1.msra.mxu0 %v1090
    %1252 = vmatprep.subr.mxu0 0.0
    %1253 = vmatpush1.msra.mxu0 %v1091
    %1254 = vmatprep.subr.mxu0 0.0
    %1255 = vmatpush1.msra.mxu0 %v1092
    %1256 = vmatprep.subr.mxu0 0.0
    %1257 = vmatpush1.msra.mxu0 %v1093
    %1258 = vmatprep.subr.mxu0 0.0
    %1259 = vmatpush1.msra.mxu0 %v1094
    %1260 = vmatprep.subr.mxu0 0.0
    %1261 = vmatpush1.msra.mxu0 %v1095
    %1262 = vmatprep.subr.mxu0 0.0
    %1263 = vmatpush1.msra.mxu0 %v1096
    %1264 = vmatprep.subr.mxu0 0.0
    %1265 = vmatpush1.msra.mxu0 %v1097
    %1266 = vmatprep.subr.mxu0 0.0
    %1267 = vmatpush1.msra.mxu0 %v1098
    %1268 = vmatprep.subr.mxu0 0.0
    %1269 = vmatpush1.msra.mxu0 %v1099
    %1270 = vmatprep.subr.mxu0 0.0
    %1271 = vmatpush1.msra.mxu0 %v1100
    %1272 = vmatprep.subr.mxu0 0.0
    %1273 = vmatpush1.msra.mxu0 %v1101
    %1274 = vmatprep.subr.mxu0 0.0
    %1275 = vmatpush1.msra.mxu0 %v1102
    %1276 = vmatprep.subr.mxu0 0.0
    %1277 = vmatpush1.msra.mxu0 %v1103
    %1278 = vmatprep.subr.mxu0 0.0
    %1279 = vmatpush1.msra.mxu0 %v1104
    %1280 = vmatprep.subr.mxu0 0.0
    %1281 = vmatpush1.msra.mxu0 %v1105
    %1282 = vmatprep.subr.mxu0 0.0
    %1283 = vmatpush1.msra.mxu0 %v1106
    %1284 = vmatprep.subr.mxu0 0.0
    %1285 = vmatpush1.msra.mxu0 %v1107
    %1286 = vmatprep.subr.mxu0 0.0
    %1287 = vmatpush1.msra.mxu0 %v1108
    %1288 = vmatprep.subr.mxu0 0.0
    %1289 = vmatpush1.msra.mxu0 %v1109
    %1290 = vmatprep.subr.mxu0 0.0
    %1291 = vmatpush1.msra.mxu0 %v1110
    %1292 = vmatprep.subr.mxu0 0.0
    %1293 = vmatpush1.msra.mxu0 %v1111
    %1294 = vmatprep.subr.mxu0 0.0
    %1295 = vmatpush1.msra.mxu0 %v1112
    %1296 = vmatprep.subr.mxu0 0.0
    %1297 = vmatpush1.msra.mxu0 %v1113
    %1298 = vmatprep.subr.mxu0 0.0
    %1299 = vmatpush1.msra.mxu0 %v1114
    %1300 = vmatprep.subr.mxu0 0.0
    %1301 = vmatpush1.msra.mxu0 %v1115
    %1302 = vmatprep.subr.mxu0 0.0
    %1303 = vmatpush1.msra.mxu0 %v1116
    %1304 = vmatprep.subr.mxu0 0.0
    %1305 = vmatpush1.msra.mxu0 %v1117
    %1306 = vmatprep.subr.mxu0 0.0
    %1307 = vmatpush1.msra.mxu0 %v1118
    %1308 = vmatprep.subr.mxu0 0.0
    %1309 = vmatpush1.msra.mxu0 %v1119
    %1310 = vmatprep.subr.mxu0 0.0
    %1311 = vmatpush1.msra.mxu0 %v1120
    %1312 = vmatprep.subr.mxu0 0.0
    %1313 = vmatpush1.msra.mxu0 %v1121
    %1314 = vmatprep.mubr.f32.mxu0 %v1123
    %1315 = vmatmul.mubr.f32.gmra.mrb[0].mxu0 %v1122
    %v1316 = vpop.f32.mrb[0].mxu0
    %v1317 = vadd.f32 %v1173, %v1316
    %v1318 = vpop.f32.mrb[0].mxu0
    %1319 = vmatprep.mubr.f32.mxu0 %v1125
    %1320 = vmatmul.mubr.f32.gmra.mrb[0].mxu0 %v1124
    %v1321 = vpop.f32.mrb[0].mxu0
    %v1322 = vadd.f32 %v1178, %v1321
    %v1323 = vpop.f32.mrb[0].mxu0
    %1324 = vmatprep.mubr.f32.mxu0 %v1127
    %1325 = vmatmul.mubr.f32.gmra.mrb[0].mxu0 %v1126
    %v1326 = vpop.f32.mrb[0].mxu0
    %v1327 = vadd.f32 %v1183, %v1326
    %v1328 = vpop.f32.mrb[0].mxu0
    %1329 = vmatprep.mubr.f32.mxu0 %v1129
    %1330 = vmatmul.mubr.f32.gmra.mrb[0].mxu0 %v1128
    %v1331 = vpop.f32.mrb[0].mxu0
    %v1332 = vadd.f32 %v1188, %v1331
    %v1333 = vpop.f32.mrb[0].mxu0
    %1334 = vmatprep.mubr.f32.mxu0 %v1131
    %1335 = vmatmul.mubr.f32.gmra.mrb[0].mxu0 %v1130
    %v1336 = vpop.f32.mrb[0].mxu0
    %v1337 = vadd.f32 %v1193, %v1336
    %v1338 = vpop.f32.mrb[0].mxu0
    %1339 = vmatprep.mubr.f32.mxu0 %v1133
    %1340 = vmatmul.mubr.f32.gmra.mrb[0].mxu0 %v1132
    %v1341 = vpop.f32.mrb[0].mxu0
    %v1342 = vadd.f32 %v1198, %v1341
    %v1343 = vpop.f32.mrb[0].mxu0
    %1344 = vmatprep.mubr.f32.mxu0 %v1135
    %1345 = vmatmul.mubr.f32.gmra.mrb[0].mxu0 %v1134
    %v1346 = vpop.f32.mrb[0].mxu0
    %v1347 = vadd.f32 %v1203, %v1346
    %v1348 = vpop.f32.mrb[0].mxu0
    %1349 = vmatprep.mubr.f32.mxu0 %v1137
    %1350 = vmatmul.mubr.f32.gmra.mrb[0].mxu0 %v1136
    %v1351 = vpop.f32.mrb[0].mxu0
    %v1352 = vadd.f32 %v1208, %v1351
    %v1353 = vpop.f32.mrb[0].mxu0
    %1354 = vmatprep.mubr.f32.mxu0 %v1139
    %1355 = vmatmul.mubr.f32.gmra.mrb[0].mxu0 %v1138
    %v1356 = vpop.f32.mrb[0].mxu0
    %v1357 = vadd.f32 %v1213, %v1356
    %v1358 = vpop.f32.mrb[0].mxu0
    %1359 = vmatprep.mubr.f32.mxu0 %v1141
    %1360 = vmatmul.mubr.f32.gmra.mrb[0].mxu0 %v1140
    %v1361 = vpop.f32.mrb[0].mxu0
    %v1362 = vadd.f32 %v1218, %v1361
    %v1363 = vpop.f32.mrb[0].mxu0
    %1364 = vmatprep.mubr.f32.mxu0 %v1143
    %1365 = vmatmul.mubr.f32.gmra.mrb[0].mxu0 %v1142
    %v1366 = vpop.f32.mrb[0].mxu0
    %v1367 = vadd.f32 %v1223, %v1366
    %v1368 = vpop.f32.mrb[0].mxu0
    %1369 = vmatprep.mubr.f32.mxu0 %v1145
    %1370 = vmatmul.mubr.f32.gmra.mrb[0].mxu0 %v1144
    %v1371 = vpop.f32.mrb[0].mxu0
    %v1372 = vadd.f32 %v1228, %v1371
    %v1373 = vpop.f32.mrb[0].mxu0
    %1374 = vmatprep.mubr.f32.mxu0 %v1147
    %1375 = vmatmul.mubr.f32.gmra.mrb[0].mxu0 %v1146
    %v1376 = vpop.f32.mrb[0].mxu0
    %v1377 = vadd.f32 %v1233, %v1376
    %v1378 = vpop.f32.mrb[0].mxu0
    %1379 = vmatprep.mubr.f32.mxu0 %v1149
    %1380 = vmatmul.mubr.f32.gmra.mrb[0].mxu0 %v1148
    %v1381 = vpop.f32.mrb[0].mxu0
    %v1382 = vadd.f32 %v1238, %v1381
    %v1383 = vpop.f32.mrb[0].mxu0
    %1384 = vmatprep.mubr.f32.mxu0 %v1151
    %1385 = vmatmul.mubr.f32.gmra.mrb[0].mxu0 %v1150
    %v1386 = vpop.f32.mrb[0].mxu0
    %v1387 = vadd.f32 %v1243, %v1386
    %v1388 = vpop.f32.mrb[0].mxu0
    %1389 = vmatprep.mubr.f32.mxu0 %v1153
    %1390 = vmatmul.mubr.f32.gmra.mrb[0].mxu0 %v1152
    %v1391 = vpop.f32.mrb[0].mxu0
    %v1392 = vadd.f32 %v1248, %v1391
    %v1393 = vpop.f32.mrb[0].mxu0
    %1394 = vdwg.mxu0
    %v1395 = vtanh.pop %v1317
    %v1396 = vtanh.pop %v1322
    %v1397 = vtanh.pop %v1327
    %v1398 = vtanh.pop %v1332
    %v1399 = vtanh.pop %v1337
    %v1400 = vtanh.pop %v1342
    %v1401 = vtanh.pop %v1347
    %v1402 = vtanh.pop %v1352
    %v1403 = vtanh.pop %v1357
    %v1404 = vtanh.pop %v1362
    %v1405 = vtanh.pop %v1367
    %v1406 = vtanh.pop %v1372
    %v1407 = vtanh.pop %v1377
    %v1408 = vtanh.pop %v1382
    %v1409 = vtanh.pop %v1387
    %v1410 = vtanh.pop %v1392
    %v1411 = vld [vmem:[%s5] sm:$0xff]
    %v1412 = vld [vmem:[%s5 + $0x8] sm:$0xff]
    %v1413 = vld [vmem:[%s5 + $0x10] sm:$0xff]
    %v1414 = vld [vmem:[%s5 + $0x18] sm:$0xff]
    %v1415 = vld [vmem:[%s5 + $0x20] sm:$0xff]
    %v1416 = vld [vmem:[%s5 + $0x28] sm:$0xff]
    %v1417 = vld [vmem:[%s5 + $0x30] sm:$0xff]
    %v1418 = vld [vmem:[%s5 + $0x38] sm:$0xff]
    %v1419 = vld [vmem:[%s5 + $0x40] sm:$0xff]
    %v1420 = vld [vmem:[%s5 + $0x48] sm:$0xff]
    %v1421 = vld [vmem:[%s5 + $0x50] sm:$0xff]
    %v1422 = vld [vmem:[%s5 + $0x58] sm:$0xff]
    %v1423 = vld [vmem:[%s5 + $0x60] sm:$0xff]
    %v1424 = vld [vmem:[%s5 + $0x68] sm:$0xff]
    %v1425 = vld [vmem:[%s5 + $0x70] sm:$0xff]
    %v1426 = vld [vmem:[%s5 + $0x78] sm:$0xff]
    %v1427 = vld [vmem:[%s11] sm:$0xff]
    %v1428 = vld [vmem:[%s11 + $0x8] sm:$0xff]
    %v1429 = vld [vmem:[%s11 + $0x10] sm:$0xff]
    %v1430 = vld [vmem:[%s11 + $0x18] sm:$0xff]
    %v1431 = vld [vmem:[%s11 + $0x20] sm:$0xff]
    %v1432 = vld [vmem:[%s11 + $0x28] sm:$0xff]
    %v1433 = vld [vmem:[%s11 + $0x30] sm:$0xff]
    %v1434 = vld [vmem:[%s11 + $0x38] sm:$0xff]
    %v1435 = vld [vmem:[%s11 + $0x40] sm:$0xff]
    %v1436 = vld [vmem:[%s11 + $0x48] sm:$0xff]
    %v1437 = vld [vmem:[%s11 + $0x50] sm:$0xff]
    %v1438 = vld [vmem:[%s11 + $0x58] sm:$0xff]
    %v1439 = vld [vmem:[%s11 + $0x60] sm:$0xff]
    %v1440 = vld [vmem:[%s11 + $0x68] sm:$0xff]
    %v1441 = vld [vmem:[%s11 + $0x70] sm:$0xff]
    %v1442 = vld [vmem:[%s11 + $0x78] sm:$0xff]
    %1444 = vset.pattern.permute.xlu0 0
    %1445 = vperm.xlu0 %1444, %v1427
    %v1446 = vpop.permute.xlu0 %1445
    %1449 = vset.pattern.permute.xlu0 0
    %1450 = vperm.xlu0 %1449, %v1428
    %v1451 = vpop.permute.xlu0 %1450
    %1454 = vset.pattern.permute.xlu0 0
    %1455 = vperm.xlu0 %1454, %v1429
    %v1456 = vpop.permute.xlu0 %1455
    %1459 = vset.pattern.permute.xlu0 0
    %1460 = vperm.xlu0 %1459, %v1430
    %v1461 = vpop.permute.xlu0 %1460
    %1464 = vset.pattern.permute.xlu0 0
    %1465 = vperm.xlu0 %1464, %v1431
    %v1466 = vpop.permute.xlu0 %1465
    %1469 = vset.pattern.permute.xlu0 0
    %1470 = vperm.xlu0 %1469, %v1432
    %v1471 = vpop.permute.xlu0 %1470
    %1474 = vset.pattern.permute.xlu0 0
    %1475 = vperm.xlu0 %1474, %v1433
    %v1476 = vpop.permute.xlu0 %1475
    %1479 = vset.pattern.permute.xlu0 0
    %1480 = vperm.xlu0 %1479, %v1434
    %v1481 = vpop.permute.xlu0 %1480
    %1484 = vset.pattern.permute.xlu0 0
    %1485 = vperm.xlu0 %1484, %v1435
    %v1486 = vpop.permute.xlu0 %1485
    %1489 = vset.pattern.permute.xlu0 0
    %1490 = vperm.xlu0 %1489, %v1436
    %v1491 = vpop.permute.xlu0 %1490
    %1494 = vset.pattern.permute.xlu0 0
    %1495 = vperm.xlu0 %1494, %v1437
    %v1496 = vpop.permute.xlu0 %1495
    %1499 = vset.pattern.permute.xlu0 0
    %1500 = vperm.xlu0 %1499, %v1438
    %v1501 = vpop.permute.xlu0 %1500
    %1504 = vset.pattern.permute.xlu0 0
    %1505 = vperm.xlu0 %1504, %v1439
    %v1506 = vpop.permute.xlu0 %1505
    %1509 = vset.pattern.permute.xlu0 0
    %1510 = vperm.xlu0 %1509, %v1440
    %v1511 = vpop.permute.xlu0 %1510
    %1514 = vset.pattern.permute.xlu0 0
    %1515 = vperm.xlu0 %1514, %v1441
    %v1516 = vpop.permute.xlu0 %1515
    %1519 = vset.pattern.permute.xlu0 0
    %1520 = vperm.xlu0 %1519, %v1442
    %v1521 = vpop.permute.xlu0 %1520
    %1523 = vmatprep.subr.mxu0 0.0
    %1524 = vmatpush1.msra.mxu0 %v1395
    %1525 = vmatprep.subr.mxu0 0.0
    %1526 = vmatpush1.msra.mxu0 %v1396
    %1527 = vmatprep.subr.mxu0 0.0
    %1528 = vmatpush1.msra.mxu0 %v1397
    %1529 = vmatprep.subr.mxu0 0.0
    %1530 = vmatpush1.msra.mxu0 %v1398
    %1531 = vmatprep.subr.mxu0 0.0
    %1532 = vmatpush1.msra.mxu0 %v1399
    %1533 = vmatprep.subr.mxu0 0.0
    %1534 = vmatpush1.msra.mxu0 %v1400
    %1535 = vmatprep.subr.mxu0 0.0
    %1536 = vmatpush1.msra.mxu0 %v1401
    %1537 = vmatprep.subr.mxu0 0.0
    %1538 = vmatpush1.msra.mxu0 %v1402
    %1539 = vmatprep.subr.mxu0 0.0
    %1540 = vmatpush1.msra.mxu0 %v1403
    %1541 = vmatprep.subr.mxu0 0.0
    %1542 = vmatpush1.msra.mxu0 %v1404
    %1543 = vmatprep.subr.mxu0 0.0
    %1544 = vmatpush1.msra.mxu0 %v1405
    %1545 = vmatprep.subr.mxu0 0.0
    %1546 = vmatpush1.msra.mxu0 %v1406
    %1547 = vmatprep.subr.mxu0 0.0
    %1548 = vmatpush1.msra.mxu0 %v1407
    %1549 = vmatprep.subr.mxu0 0.0
    %1550 = vmatpush1.msra.mxu0 %v1408
    %1551 = vmatprep.subr.mxu0 0.0
    %1552 = vmatpush1.msra.mxu0 %v1409
    %1553 = vmatprep.subr.mxu0 0.0
    %1554 = vmatpush1.msra.mxu0 %v1410
    %1555 = vmatprep.subr.mxu0 0.0
    %1556 = vmatpush1.msra.mxu0 0.0
    %1557 = vmatprep.subr.mxu0 0.0
    %1558 = vmatpush1.msra.mxu0 0.0
    %1559 = vmatprep.subr.mxu0 0.0
    %1560 = vmatpush1.msra.mxu0 0.0
    %1561 = vmatprep.subr.mxu0 0.0
    %1562 = vmatpush1.msra.mxu0 0.0
    %1563 = vmatprep.subr.mxu0 0.0
    %1564 = vmatpush1.msra.mxu0 0.0
    %1565 = vmatprep.subr.mxu0 0.0
    %1566 = vmatpush1.msra.mxu0 0.0
    %1567 = vmatprep.subr.mxu0 0.0
    %1568 = vmatpush1.msra.mxu0 0.0
    %1569 = vmatprep.subr.mxu0 0.0
    %1570 = vmatpush1.msra.mxu0 0.0
    %1571 = vmatprep.subr.mxu0 0.0
    %1572 = vmatpush1.msra.mxu0 0.0
    %1573 = vmatprep.subr.mxu0 0.0
    %1574 = vmatpush1.msra.mxu0 0.0
    %1575 = vmatprep.subr.mxu0 0.0
    %1576 = vmatpush1.msra.mxu0 0.0
    %1577 = vmatprep.subr.mxu0 0.0
    %1578 = vmatpush1.msra.mxu0 0.0
    %1579 = vmatprep.subr.mxu0 0.0
    %1580 = vmatpush1.msra.mxu0 0.0
    %1581 = vmatprep.subr.mxu0 0.0
    %1582 = vmatpush1.msra.mxu0 0.0
    %1583 = vmatprep.subr.mxu0 0.0
    %1584 = vmatpush1.msra.mxu0 0.0
    %1585 = vmatprep.subr.mxu0 0.0
    %1586 = vmatpush1.msra.mxu0 0.0
    %1587 = vmatprep.mubr.f32.mxu0 0.0
    %1588 = vmatmul.mubr.f32.gmra.mrb[0].mxu0 %v1411
    %v1589 = vpop.f32.mrb[0].mxu0
    %v1590 = vadd.f32 %v1446, %v1589
    %v1591 = vpop.f32.mrb[0].mxu0
    %1592 = vmatprep.mubr.f32.mxu0 0.0
    %1593 = vmatmul.mubr.f32.gmra.mrb[0].mxu0 %v1412
    %v1594 = vpop.f32.mrb[0].mxu0
    %v1595 = vadd.f32 %v1451, %v1594
    %v1596 = vpop.f32.mrb[0].mxu0
    %1597 = vmatprep.mubr.f32.mxu0 0.0
    %1598 = vmatmul.mubr.f32.gmra.mrb[0].mxu0 %v1413
    %v1599 = vpop.f32.mrb[0].mxu0
    %v1600 = vadd.f32 %v1456, %v1599
    %v1601 = vpop.f32.mrb[0].mxu0
    %1602 = vmatprep.mubr.f32.mxu0 0.0
    %1603 = vmatmul.mubr.f32.gmra.mrb[0].mxu0 %v1414
    %v1604 = vpop.f32.mrb[0].mxu0
    %v1605 = vadd.f32 %v1461, %v1604
    %v1606 = vpop.f32.mrb[0].mxu0
    %1607 = vmatprep.mubr.f32.mxu0 0.0
    %1608 = vmatmul.mubr.f32.gmra.mrb[0].mxu0 %v1415
    %v1609 = vpop.f32.mrb[0].mxu0
    %v1610 = vadd.f32 %v1466, %v1609
    %v1611 = vpop.f32.mrb[0].mxu0
    %1612 = vmatprep.mubr.f32.mxu0 0.0
    %1613 = vmatmul.mubr.f32.gmra.mrb[0].mxu0 %v1416
    %v1614 = vpop.f32.mrb[0].mxu0
    %v1615 = vadd.f32 %v1471, %v1614
    %v1616 = vpop.f32.mrb[0].mxu0
    %1617 = vmatprep.mubr.f32.mxu0 0.0
    %1618 = vmatmul.mubr.f32.gmra.mrb[0].mxu0 %v1417
    %v1619 = vpop.f32.mrb[0].mxu0
    %v1620 = vadd.f32 %v1476, %v1619
    %v1621 = vpop.f32.mrb[0].mxu0
    %1622 = vmatprep.mubr.f32.mxu0 0.0
    %1623 = vmatmul.mubr.f32.gmra.mrb[0].mxu0 %v1418
    %v1624 = vpop.f32.mrb[0].mxu0
    %v1625 = vadd.f32 %v1481, %v1624
    %v1626 = vpop.f32.mrb[0].mxu0
    %1627 = vmatprep.mubr.f32.mxu0 0.0
    %1628 = vmatmul.mubr.f32.gmra.mrb[0].mxu0 %v1419
    %v1629 = vpop.f32.mrb[0].mxu0
    %v1630 = vadd.f32 %v1486, %v1629
    %v1631 = vpop.f32.mrb[0].mxu0
    %1632 = vmatprep.mubr.f32.mxu0 0.0
    %1633 = vmatmul.mubr.f32.gmra.mrb[0].mxu0 %v1420
    %v1634 = vpop.f32.mrb[0].mxu0
    %v1635 = vadd.f32 %v1491, %v1634
    %v1636 = vpop.f32.mrb[0].mxu0
    %1637 = vmatprep.mubr.f32.mxu0 0.0
    %1638 = vmatmul.mubr.f32.gmra.mrb[0].mxu0 %v1421
    %v1639 = vpop.f32.mrb[0].mxu0
    %v1640 = vadd.f32 %v1496, %v1639
    %v1641 = vpop.f32.mrb[0].mxu0
    %1642 = vmatprep.mubr.f32.mxu0 0.0
    %1643 = vmatmul.mubr.f32.gmra.mrb[0].mxu0 %v1422
    %v1644 = vpop.f32.mrb[0].mxu0
    %v1645 = vadd.f32 %v1501, %v1644
    %v1646 = vpop.f32.mrb[0].mxu0
    %1647 = vmatprep.mubr.f32.mxu0 0.0
    %1648 = vmatmul.mubr.f32.gmra.mrb[0].mxu0 %v1423
    %v1649 = vpop.f32.mrb[0].mxu0
    %v1650 = vadd.f32 %v1506, %v1649
    %v1651 = vpop.f32.mrb[0].mxu0
    %1652 = vmatprep.mubr.f32.mxu0 0.0
    %1653 = vmatmul.mubr.f32.gmra.mrb[0].mxu0 %v1424
    %v1654 = vpop.f32.mrb[0].mxu0
    %v1655 = vadd.f32 %v1511, %v1654
    %v1656 = vpop.f32.mrb[0].mxu0
    %1657 = vmatprep.mubr.f32.mxu0 0.0
    %1658 = vmatmul.mubr.f32.gmra.mrb[0].mxu0 %v1425
    %v1659 = vpop.f32.mrb[0].mxu0
    %v1660 = vadd.f32 %v1516, %v1659
    %v1661 = vpop.f32.mrb[0].mxu0
    %1662 = vmatprep.mubr.f32.mxu0 0.0
    %1663 = vmatmul.mubr.f32.gmra.mrb[0].mxu0 %v1426
    %v1664 = vpop.f32.mrb[0].mxu0
    %v1665 = vadd.f32 %v1521, %v1664
    %v1666 = vpop.f32.mrb[0].mxu0
    %1667 = vdwg.mxu0
    %v1668 = vtanh.pop %v1590
    %v1669 = vtanh.pop %v1595
    %v1670 = vtanh.pop %v1600
    %v1671 = vtanh.pop %v1605
    %v1672 = vtanh.pop %v1610
    %v1673 = vtanh.pop %v1615
    %v1674 = vtanh.pop %v1620
    %v1675 = vtanh.pop %v1625
    %v1676 = vtanh.pop %v1630
    %v1677 = vtanh.pop %v1635
    %v1678 = vtanh.pop %v1640
    %v1679 = vtanh.pop %v1645
    %v1680 = vtanh.pop %v1650
    %v1681 = vtanh.pop %v1655
    %v1682 = vtanh.pop %v1660
    %v1683 = vtanh.pop %v1665
    %v1684 = vld [vmem:[%s6] sm:$0xff]
    %v1685 = vld [vmem:[%s12] sm:$0xff]
    %1687 = vset.pattern.permute.xlu0 0
    %1688 = vperm.xlu0 %1687, %v1685
    %v1689 = vpop.permute.xlu0 %1688
    %1691 = vmatprep.subr.mxu0 0.0
    %1692 = vmatpush1.msra.mxu0 %v1668
    %1693 = vmatprep.subr.mxu0 0.0
    %1694 = vmatpush1.msra.mxu0 %v1669
    %1695 = vmatprep.subr.mxu0 0.0
    %1696 = vmatpush1.msra.mxu0 %v1670
    %1697 = vmatprep.subr.mxu0 0.0
    %1698 = vmatpush1.msra.mxu0 %v1671
    %1699 = vmatprep.subr.mxu0 0.0
    %1700 = vmatpush1.msra.mxu0 %v1672
    %1701 = vmatprep.subr.mxu0 0.0
    %1702 = vmatpush1.msra.mxu0 %v1673
    %1703 = vmatprep.subr.mxu0 0.0
    %1704 = vmatpush1.msra.mxu0 %v1674
    %1705 = vmatprep.subr.mxu0 0.0
    %1706 = vmatpush1.msra.mxu0 %v1675
    %1707 = vmatprep.subr.mxu0 0.0
    %1708 = vmatpush1.msra.mxu0 %v1676
    %1709 = vmatprep.subr.mxu0 0.0
    %1710 = vmatpush1.msra.mxu0 %v1677
    %1711 = vmatprep.subr.mxu0 0.0
    %1712 = vmatpush1.msra.mxu0 %v1678
    %1713 = vmatprep.subr.mxu0 0.0
    %1714 = vmatpush1.msra.mxu0 %v1679
    %1715 = vmatprep.subr.mxu0 0.0
    %1716 = vmatpush1.msra.mxu0 %v1680
    %1717 = vmatprep.subr.mxu0 0.0
    %1718 = vmatpush1.msra.mxu0 %v1681
    %1719 = vmatprep.subr.mxu0 0.0
    %1720 = vmatpush1.msra.mxu0 %v1682
    %1721 = vmatprep.subr.mxu0 0.0
    %1722 = vmatpush1.msra.mxu0 %v1683
    %1723 = vmatprep.subr.mxu0 0.0
    %1724 = vmatpush1.msra.mxu0 0.0
    %1725 = vmatprep.subr.mxu0 0.0
    %1726 = vmatpush1.msra.mxu0 0.0
    %1727 = vmatprep.subr.mxu0 0.0
    %1728 = vmatpush1.msra.mxu0 0.0
    %1729 = vmatprep.subr.mxu0 0.0
    %1730 = vmatpush1.msra.mxu0 0.0
    %1731 = vmatprep.subr.mxu0 0.0
    %1732 = vmatpush1.msra.mxu0 0.0
    %1733 = vmatprep.subr.mxu0 0.0
    %1734 = vmatpush1.msra.mxu0 0.0
    %1735 = vmatprep.subr.mxu0 0.0
    %1736 = vmatpush1.msra.mxu0 0.0
    %1737 = vmatprep.subr.mxu0 0.0
    %1738 = vmatpush1.msra.mxu0 0.0
    %1739 = vmatprep.subr.mxu0 0.0
    %1740 = vmatpush1.msra.mxu0 0.0
    %1741 = vmatprep.subr.mxu0 0.0
    %1742 = vmatpush1.msra.mxu0 0.0
    %1743 = vmatprep.subr.mxu0 0.0
    %1744 = vmatpush1.msra.mxu0 0.0
    %1745 = vmatprep.subr.mxu0 0.0
    %1746 = vmatpush1.msra.mxu0 0.0
    %1747 = vmatprep.subr.mxu0 0.0
    %1748 = vmatpush1.msra.mxu0 0.0
    %1749 = vmatprep.subr.mxu0 0.0
    %1750 = vmatpush1.msra.mxu0 0.0
    %1751 = vmatprep.subr.mxu0 0.0
    %1752 = vmatpush1.msra.mxu0 0.0
    %1753 = vmatprep.subr.mxu0 0.0
    %1754 = vmatpush1.msra.mxu0 0.0
    %1755 = vmatprep.mubr.f32.mxu0 0.0
    %1756 = vmatmul.mubr.f32.gmra.mrb[0].mxu0 %v1684
    %v1757 = vpop.f32.mrb[0].mxu0
    %v1758 = vadd.f32 %v1689, %v1757
    %v1759 = vpop.f32.mrb[0].mxu0
    %1760 = vdwg.mxu0
    %1761 = vst [vmem:[#allocation2] sm:$0xff] %v1758
    // Predicated region
    $region54: #{tpu_custom_call.1} parent=1 // pred_check
      _
    $region55: #{tpu_custom_call.1} parent=1 // pred_check_branch
      %1763 = sbr.rel (0) target = $region57
    $region56: #{tpu_custom_call.1} parent=1 // pred_region
      %s1765 = ssub.s32 128, 128
      %1766 = vsyncadd [#allocation3], %s1765
      %s1768 = sshll.u32 [#allocation2], 4
      %s1769 = int_to_ptr.vmem [resolvable:$true] %s1768
      %1771 = dma.vmem_to_hbm [thread:$0]  %s1769, 128, %s13, [#allocation3]
    $region57: #{tpu_custom_call.1} parent=1 // pred_fallthru
      _
    // Predicated region
    $region58: #{tpu_custom_call.1} parent=1 // pred_check
      _
    $region59: #{tpu_custom_call.1} parent=1 // pred_check_branch
      %1773 = sbr.rel (0) target = $region61
    $region60: #{tpu_custom_call.1} parent=1 // pred_region
      %1774 = dma.done [#allocation3], 128
    $region61: #{tpu_custom_call.1} parent=1 // pred_fallthru
      _
    %1775 = vsyncpa [#allocation3], 1

</llo_original>
